<compile_context>
chip_gen: v7x
topology: tpu7x:2x2x1
jax: 0.10.0
libtpu: 0.0.40
codegen_flags: <defaults>
</compile_context>

<pallas_src>
import functools

import jax
import jax.numpy as jnp
from jax import lax
from jax.experimental import pallas as pl
from jax.experimental.pallas import tpu as pltpu

BN_EPS = 1e-5
_VMEM_LIMIT = 32 * 1024 * 1024


# ------------------------------ kernel helpers ------------------------------ #
def _zero_halo(pad_ref, pads):
    """Zero ONLY the halo border of the padded VMEM slab.

    The interior is fully rewritten every grid step, so it never needs
    clearing; the border is re-zeroed every step (cheap) so the kernel is
    correct regardless of how a "parallel" grid is sharded across cores.
    """
    pt, pb, plft, prt = pads
    _, Hp, Wp, C = pad_ref.shape
    if pt:
        pad_ref[0, 0:pt, :, :] = jnp.zeros((pt, Wp, C), pad_ref.dtype)
    if pb:
        pad_ref[0, Hp - pb:Hp, :, :] = jnp.zeros((pb, Wp, C), pad_ref.dtype)
    if plft:
        pad_ref[0, :, 0:plft, :] = jnp.zeros((Hp, plft, C), pad_ref.dtype)
    if prt:
        pad_ref[0, :, Wp - prt:Wp, :] = jnp.zeros((Hp, prt, C), pad_ref.dtype)


def _bnrelu_pad_conv(x_ref, sb_ref, w_ref, pad_ref, *, taps_h, taps_w, pads):
    """relu(x*scale + bias) -> padded VMEM slab -> im2col -> one bf16 MXU dot.

    Returns (y, out): y = activated input (H*W, Cin) f32,
                      out = conv result (H*W, Cout) f32.
    """
    H, W, Cin = x_ref.shape[1], x_ref.shape[2], x_ref.shape[3]
    pt, _, plft, _ = pads

    x = x_ref[...].astype(jnp.float32).reshape(H * W, Cin)
    sb = sb_ref[...]
    y = jnp.maximum(x * sb[0:1, :] + sb[1:2, :], 0.0)      # relu(bn(x))

    _zero_halo(pad_ref, pads)
    pad_ref[0, pt:pt + H, plft:plft + W, :] = y.reshape(H, W, Cin)

    # im2col: one (H*W, taps*Cin) operand -> a single MXU matmul (fine for the
    # small Cin used here; see TODO above for production Cin).
    patches = []
    for kh in range(taps_h):
        for kw in range(taps_w):
            patches.append(pad_ref[0, kh:kh + H, kw:kw + W, :].reshape(H * W, Cin))
    pm = jnp.concatenate(patches, axis=-1).astype(jnp.bfloat16)
    out = jnp.dot(pm, w_ref[...], preferred_element_type=jnp.float32)
    return y, out


# ------------------------------- Pallas kernels ------------------------------ #
def fused1_kernel(*refs, taps_h, taps_w, pads, emit_shortcut):
    """relu(bn1(x)) -> conv1 (+ fused 1x1 projection shortcut) + bn2 partial stats."""
    if emit_shortcut:
        x_ref, sb1_ref, w_ref, wsc_ref, o_ref, sc_ref, st_ref, pad_ref = refs
    else:
        x_ref, sb1_ref, w_ref, o_ref, st_ref, pad_ref = refs
        wsc_ref = sc_ref = None

    H, W = x_ref.shape[1], x_ref.shape[2]
    P = o_ref.shape[3]

    y, out = _bnrelu_pad_conv(x_ref, sb1_ref, w_ref, pad_ref,
                              taps_h=taps_h, taps_w=taps_w, pads=pads)
    o_ref[...] = out.reshape(1, H, W, P).astype(o_ref.dtype)

    if emit_shortcut:
        csc = wsc_ref.shape[0]
        sc = jnp.dot(y[:, :csc].astype(jnp.bfloat16), wsc_ref[...],
                     preferred_element_type=jnp.float32)
        sc_ref[...] = sc.reshape(1, H, W, P).astype(sc_ref.dtype)

    # Per-image partial bn2 stats (finalized in the wrapper) — no cross-step
    # accumulator, so the N grid stays truly "parallel" (v7x megacore friendly).
    s = jnp.sum(out, axis=0, keepdims=True)
    sq = jnp.sum(out * out, axis=0, keepdims=True)
    st_ref[...] = jnp.concatenate([s, sq], axis=0).reshape(1, 2, P)


def fused2_kernel(o1_ref, sb2_ref, w_ref, res_ref, sbres_ref, out_ref, pad_ref,
                  *, recompute_res):
    """relu(bn2(o1)) -> conv2 3x3 (stride 1, pad 1) -> + residual shortcut."""
    H, W = o1_ref.shape[1], o1_ref.shape[2]
    P = out_ref.shape[3]

    _, conv = _bnrelu_pad_conv(o1_ref, sb2_ref, w_ref, pad_ref,
                               taps_h=3, taps_w=3, pads=(1, 1, 1, 1))

    r = res_ref[...].astype(jnp.float32).reshape(H * W, P)
    if recompute_res:
        # Identity shortcut: recompute relu(bn1(x)) from x here — avoids the
        # eye() matmul and an (N,H,W,C) HBM write+read in/after fused1.
        sb = sbres_ref[...]
        r = jnp.maximum(r * sb[0:1, :] + sb[1:2, :], 0.0)

    out_ref[...] = (conv + r).reshape(1, H, W, P).astype(out_ref.dtype)


# -------------------------------- pallas_call wrappers ----------------------- #
def fused1_call(x_in, sb1, w1_k, wsc_k, *, taps_h, taps_w, pads, planes):
    N, H, W, Cin = x_in.shape
    K1 = taps_h * taps_w * Cin
    Hp = H + pads[0] + pads[1]
    Wp = W + pads[2] + pads[3]
    emit_shortcut = wsc_k is not None

    in_specs = [pl.BlockSpec((1, H, W, Cin), lambda n: (n, 0, 0, 0)),
                pl.BlockSpec((2, Cin), lambda n: (0, 0)),
                pl.BlockSpec((K1, planes), lambda n: (0, 0))]
    inputs = [x_in, sb1, w1_k]
    out_shapes = [jax.ShapeDtypeStruct((N, H, W, planes), jnp.bfloat16)]   # conv1 out
    out_specs = [pl.BlockSpec((1, H, W, planes), lambda n: (n, 0, 0, 0))]
    if emit_shortcut:
        in_specs.append(pl.BlockSpec((wsc_k.shape[0], planes), lambda n: (0, 0)))
        inputs.append(wsc_k)
        out_shapes.append(jax.ShapeDtypeStruct((N, H, W, planes), jnp.bfloat16))
        out_specs.append(pl.BlockSpec((1, H, W, planes), lambda n: (n, 0, 0, 0)))
    out_shapes.append(jax.ShapeDtypeStruct((N, 2, planes), jnp.float32))   # bn2 partials
    out_specs.append(pl.BlockSpec((1, 2, planes), lambda n: (n, 0, 0)))

    kernel = functools.partial(fused1_kernel, taps_h=taps_h, taps_w=taps_w,
                               pads=pads, emit_shortcut=emit_shortcut)
    outs = pl.pallas_call(
        kernel,
        out_shape=tuple(out_shapes),
        grid=(N,),
        in_specs=in_specs,
        out_specs=tuple(out_specs),
        scratch_shapes=[pltpu.VMEM((1, Hp, Wp, Cin), jnp.float32)],
        compiler_params=pltpu.CompilerParams(
            dimension_semantics=("parallel",),
            vmem_limit_bytes=_VMEM_LIMIT),
    )(*inputs)

    if emit_shortcut:
        o1, sc, st = outs
    else:
        o1, st = outs
        sc = None
    return o1, sc, st


def fused2_call(o1, sb2, w2_k, res, sbres, *, recompute_res, out_dtype):
    N, H, W, P = o1.shape
    kernel = functools.partial(fused2_kernel, recompute_res=recompute_res)
    return pl.pallas_call(
        kernel,
        out_shape=jax.ShapeDtypeStruct((N, H, W, P), out_dtype),
        grid=(N,),
        in_specs=[pl.BlockSpec((1, H, W, P), lambda n: (n, 0, 0, 0)),
                  pl.BlockSpec((2, P), lambda n: (0, 0)),
                  pl.BlockSpec((9 * P, P), lambda n: (0, 0)),
                  pl.BlockSpec((1, H, W, P), lambda n: (n, 0, 0, 0)),
                  pl.BlockSpec((2, P), lambda n: (0, 0))],
        out_specs=pl.BlockSpec((1, H, W, P), lambda n: (n, 0, 0, 0)),
        scratch_shapes=[pltpu.VMEM((1, H + 2, W + 2, P), jnp.float32)],
        compiler_params=pltpu.CompilerParams(
            dimension_semantics=("parallel",),
            vmem_limit_bytes=_VMEM_LIMIT),
    )(o1, sb2, w2_k, res, sbres)


# --------------------- stride-2 (space-to-depth) helpers --------------------- #
def _space_to_depth2(x):
    """(N, H, W, C) -> (N, H/2, W/2, 4C), channel order (dy, dx, c)."""
    N, H, W, C = x.shape
    x = x.reshape(N, H // 2, 2, W // 2, 2, C)
    x = jnp.transpose(x, (0, 1, 3, 2, 4, 5))
    return x.reshape(N, H // 2, W // 2, 4 * C)


def _rearrange_w1_stride2(w):
    """(3,3,C,P) HWIO weights of a stride-2 pad-1 3x3 conv -> (16C, P) weights
    of the equivalent stride-1 2x2 conv over the space-to-depth input."""
    C, P = w.shape[2], w.shape[3]
    wp = jnp.zeros((2, 2, 2, 2, C, P), jnp.float32)   # [dkh, dkw, dy, dx, c, p]
    for dkh in range(2):
        for dy in range(2):
            kh = 2 * dkh + dy - 1
            if kh < 0 or kh > 2:
                continue
            for dkw in range(2):
                for dx in range(2):
                    kw = 2 * dkw + dx - 1
                    if kw < 0 or kw > 2:
                        continue
                    wp = wp.at[dkh, dkw, dy, dx].set(w[kh, kw].astype(jnp.float32))
    return wp.reshape(2 * 2 * 4 * C, P)


# ------------------------------- block forward ------------------------------- #
def _bn_scale_bias(x, gamma, beta):
    """Training-mode BN folded to per-channel (scale, bias), shape (2, C) f32.

    Done as a single fused XLA reduction (two-pass mean/var, better numerics
    and better parallelism than a serial per-image Pallas grid)."""
    m = jnp.mean(x, axis=(0, 1, 2))
    v = jnp.mean(jnp.square(x - m), axis=(0, 1, 2))         # biased var (PyTorch BN)
    scale = gamma.astype(jnp.float32) * lax.rsqrt(v + BN_EPS)
    bias = beta.astype(jnp.float32) - m * scale
    return jnp.stack([scale, bias]).astype(jnp.float32)


def preact_block_forward(x_nchw, params, *, stride):
    """PreActBlock forward. Input/output are NCHW (PyTorch convention)."""
    in_planes = x_nchw.shape[1]
    planes = params["w1"].shape[-1]
    x = jnp.transpose(x_nchw, (0, 2, 3, 1)).astype(jnp.float32)   # -> NHWC
    N, H, W, C = x.shape

    sb1 = _bn_scale_bias(x, params["bn1_gamma"], params["bn1_beta"])   # (2, C)
    has_projection = (stride != 1) or (in_planes != planes)

    if stride == 1:
        x_in = x
        taps = 3
        pads = (1, 1, 1, 1)
        sb1_k = sb1
        w1_k = params["w1"].astype(jnp.bfloat16).reshape(9 * C, planes)
    elif stride == 2:
        # stride-2 3x3 pad-1 conv == stride-1 2x2 conv over space-to-depth(x).
        x_in = _space_to_depth2(x)
        taps = 2
        pads = (1, 0, 1, 0)                         # top/left halo only
        sb1_k = jnp.tile(sb1, (1, 4))               # per-channel -> per-phase-channel
        w1_k = _rearrange_w1_stride2(params["w1"]).astype(jnp.bfloat16)
    else:
        # TODO(synk): general stride support (only 1 and 2 are used by ResNets).
        raise NotImplementedError("stride must be 1 or 2")

    wsc_k = params["w_sc"].astype(jnp.bfloat16) if has_projection else None

    o1, sc, st = fused1_call(x_in, sb1_k, w1_k, wsc_k,
                             taps_h=taps, taps_w=taps, pads=pads, planes=planes)

    # Finalize bn2 scale/bias from the per-image partial sums (tiny XLA op).
    Ho, Wo = o1.shape[1], o1.shape[2]
    count2 = float(N * Ho * Wo)
    tot = jnp.sum(st, axis=0)                       # (2, planes) f32
    mean2 = tot[0] / count2
    var2 = tot[1] / count2 - mean2 * mean2
    scale2 = params["bn2_gamma"].astype(jnp.float32) * lax.rsqrt(var2 + BN_EPS)
    bias2 = params["bn2_beta"].astype(jnp.float32) - mean2 * scale2
    sb2 = jnp.stack([scale2, bias2])

    w2_k = params["w2"].astype(jnp.bfloat16).reshape(9 * planes, planes)

    if has_projection:
        res, sbres, recompute = sc, jnp.zeros((2, planes), jnp.float32), False
    else:
        # Identity shortcut: pass x and let fused2 recompute relu(bn1(x)).
        res, sbres, recompute = x, sb1, True

    out = fused2_call(o1, sb2, w2_k, res, sbres,
                      recompute_res=recompute, out_dtype=x_nchw.dtype)
    return jnp.transpose(out, (0, 3, 1, 2))         # -> NCHW


# --------------------------- pure-JAX reference ------------------------------ #
def _ref_bn_relu(x, g, b):
    m = jnp.mean(x, axis=(0, 1, 2), keepdims=True)
    v = jnp.mean((x - m) ** 2, axis=(0, 1, 2), keepdims=True)
    return jnp.maximum((x - m) / jnp.sqrt(v + BN_EPS) * g.reshape(1, 1, 1, -1)
                       + b.reshape(1, 1, 1, -1), 0.0)


def preact_block_ref(x_nchw, params, *, stride):
    in_planes = x_nchw.shape[1]
    planes = params["w1"].shape[-1]
    x = jnp.transpose(x_nchw, (0, 2, 3, 1))
    dn = ("NHWC", "HWIO", "NHWC")
    out = _ref_bn_relu(x, params["bn1_gamma"], params["bn1_beta"])
    if stride != 1 or in_planes != planes:
        w_sc = params["w_sc"].reshape(1, 1, in_planes, planes)
        shortcut = lax.conv_general_dilated(out, w_sc, (stride, stride), "VALID",
                                            dimension_numbers=dn)
    else:
        shortcut = out
    out = lax.conv_general_dilated(out, params["w1"], (stride, stride),
                                   ((1, 1), (1, 1)), dimension_numbers=dn)
    out = _ref_bn_relu(out, params["bn2_gamma"], params["bn2_beta"])
    out = lax.conv_general_dilated(out, params["w2"], (1, 1),
                                   ((1, 1), (1, 1)), dimension_numbers=dn)
    return jnp.transpose(out + shortcut, (0, 3, 1, 2))


# ---------------------------------- params ----------------------------------- #
def init_params(key, in_planes, planes):
    ks = jax.random.split(key, 6)
    w1 = jax.random.normal(ks[0], (3, 3, in_planes, planes), jnp.float32) * (2.0 / (9 * in_planes)) ** 0.5
    w2 = jax.random.normal(ks[1], (3, 3, planes, planes), jnp.float32) * (2.0 / (9 * planes)) ** 0.5
    w_sc = jax.random.normal(ks[2], (in_planes, planes), jnp.float32) * (2.0 / in_planes) ** 0.5
    return {
        "w1": w1,
        "w2": w2,
        "w_sc": w_sc,
        "bn1_gamma": 1.0 + 0.1 * jax.random.normal(ks[3], (in_planes,), jnp.float32),
        "bn1_beta": 0.1 * jax.random.normal(ks[4], (in_planes,), jnp.float32),
        "bn2_gamma": 1.0 + 0.1 * jax.random.normal(ks[5], (planes,), jnp.float32),
        "bn2_beta": 0.05 * jnp.ones((planes,), jnp.float32),
    }


# ----------------------------------- main ------------------------------------ #
if __name__ == "__main__":
    key = jax.random.PRNGKey(0)
    k_x, k_p1, k_p2 = jax.random.split(key, 3)

    configs = [
        (4, 4, 1),   # identity shortcut (recomputed in fused2, no sc round trip)
        (4, 8, 2),   # 1x1 projection shortcut, stride 2 (space-to-depth path)
    ]

    x = jax.random.normal(k_x, (2, 4, 16, 16), jnp.float32)  # NCHW, like PyTorch

    for (in_planes, planes, stride), kp in zip(configs, (k_p1, k_p2)):
        params = init_params(kp, in_planes, planes)
        out = jax.block_until_ready(preact_block_forward(x, params, stride=stride))
        ref = jax.block_until_ready(preact_block_ref(x, params, stride=stride))
        assert out.shape == ref.shape, (out.shape, ref.shape)
        # Tolerance accounts for intentional bf16 MXU operands / bf16 intermediates.
        if not bool(jnp.allclose(out, ref, atol=2e-2, rtol=2e-2)):
            raise AssertionError(
                f"mismatch (stride={stride}): max abs diff = "
                f"{float(jnp.max(jnp.abs(out - ref)))}")

    print("KERNEL_OK")
</pallas_src>

<mosaic_0001>
module attributes {stable_mosaic.version = 11 : i64} {
  func.func @fused1_kernel(%arg0: i32, %arg1: memref<1x16x16x4xf32, #tpu.memory_space<vmem>>, %arg2: memref<2x4xf32, #tpu.memory_space<vmem>>, %arg3: memref<36x4xbf16, #tpu.memory_space<vmem>>, %arg4: memref<1x16x16x4xbf16, #tpu.memory_space<vmem>>, %arg5: memref<1x2x4xf32, #tpu.memory_space<vmem>>, %arg6: memref<1x18x18x4xf32, #tpu.memory_space<vmem>>) attributes {dimension_semantics = [#tpu.dimension_semantics<parallel>], iteration_bounds = array<i64: 2>, scalar_prefetch = 0 : i64, scratch_operands = 1 : i64, tpu.core_type = #tpu.core_type<tc>, window_params = [{transform_indices = @transform_0, window_bounds = array<i64: 1, 16, 16, 4>}, {pipeline_mode = #tpu.pipeline_mode<synchronous>, transform_indices = @transform_1, window_bounds = array<i64: 2, 4>}, {pipeline_mode = #tpu.pipeline_mode<synchronous>, transform_indices = @transform_2, window_bounds = array<i64: 36, 4>}, {transform_indices = @transform_3, window_bounds = array<i64: 1, 16, 16, 4>}, {transform_indices = @transform_4, window_bounds = array<i64: 1, 2, 4>}]} {
    %c0 = arith.constant 0 : index
    %c0_0 = arith.constant 0 : index
    %c0_1 = arith.constant 0 : index
    %c0_2 = arith.constant 0 : index
    %0 = vector.load %arg1[%c0, %c0_0, %c0_1, %c0_2] : memref<1x16x16x4xf32, #tpu.memory_space<vmem>>, vector<1x16x16x4xf32>
    %1 = vector.shape_cast %0 : vector<1x16x16x4xf32> to vector<256x4xf32>
    %c0_3 = arith.constant 0 : index
    %c0_4 = arith.constant 0 : index
    %2 = vector.load %arg2[%c0_3, %c0_4] : memref<2x4xf32, #tpu.memory_space<vmem>>, vector<2x4xf32>
    %3 = vector.extract_strided_slice %2 {offsets = [0, 0], sizes = [1, 4], strides = [1, 1]} : vector<2x4xf32> to vector<1x4xf32>
    %4 = vector.broadcast %3 : vector<1x4xf32> to vector<256x4xf32>
    %5 = arith.mulf %1, %4 : vector<256x4xf32>
    %6 = vector.extract_strided_slice %2 {offsets = [1, 0], sizes = [1, 4], strides = [1, 1]} : vector<2x4xf32> to vector<1x4xf32>
    %7 = vector.broadcast %6 : vector<1x4xf32> to vector<256x4xf32>
    %8 = arith.addf %5, %7 : vector<256x4xf32>
    %cst = arith.constant 0.000000e+00 : f32
    %9 = vector.broadcast %cst : f32 to vector<256x4xf32>
    %10 = arith.maximumf %8, %9 : vector<256x4xf32>
    %cst_5 = arith.constant 0.000000e+00 : f32
    %11 = vector.broadcast %cst_5 : f32 to vector<1x18x4xf32>
    %c0_6 = arith.constant 0 : index
    %c0_7 = arith.constant 0 : index
    %c0_8 = arith.constant 0 : index
    %c0_9 = arith.constant 0 : index
    %12 = vector.load %arg6[%c0_6, %c0_7, %c0_8, %c0_9] : memref<1x18x18x4xf32, #tpu.memory_space<vmem>>, vector<1x1x18x4xf32>
    %13 = vector.shape_cast %12 : vector<1x1x18x4xf32> to vector<1x18x4xf32>
    %14 = vector.shape_cast %11 : vector<1x18x4xf32> to vector<1x1x18x4xf32>
    tpu.vector_store %arg6[%c0_6, %c0_7, %c0_8, %c0_9], %14 {strides = array<i32>} : memref<1x18x18x4xf32, #tpu.memory_space<vmem>>, vector<1x1x18x4xf32>,
    %cst_10 = arith.constant 0.000000e+00 : f32
    %15 = vector.broadcast %cst_10 : f32 to vector<1x18x4xf32>
    %c0_11 = arith.constant 0 : index
    %c17 = arith.constant 17 : index
    %c0_12 = arith.constant 0 : index
    %c0_13 = arith.constant 0 : index
    %16 = vector.load %arg6[%c0_11, %c17, %c0_12, %c0_13] : memref<1x18x18x4xf32, #tpu.memory_space<vmem>>, vector<1x1x18x4xf32>
    %17 = vector.shape_cast %16 : vector<1x1x18x4xf32> to vector<1x18x4xf32>
    %18 = vector.shape_cast %15 : vector<1x18x4xf32> to vector<1x1x18x4xf32>
    tpu.vector_store %arg6[%c0_11, %c17, %c0_12, %c0_13], %18 {strides = array<i32>} : memref<1x18x18x4xf32, #tpu.memory_space<vmem>>, vector<1x1x18x4xf32>,
    %cst_14 = arith.constant 0.000000e+00 : f32
    %19 = vector.broadcast %cst_14 : f32 to vector<18x1x4xf32>
    %c0_15 = arith.constant 0 : index
    %c0_16 = arith.constant 0 : index
    %c0_17 = arith.constant 0 : index
    %c0_18 = arith.constant 0 : index
    %20 = vector.load %arg6[%c0_15, %c0_16, %c0_17, %c0_18] : memref<1x18x18x4xf32, #tpu.memory_space<vmem>>, vector<1x18x1x4xf32>
    %21 = vector.shape_cast %20 : vector<1x18x1x4xf32> to vector<18x1x4xf32>
    %22 = vector.shape_cast %19 : vector<18x1x4xf32> to vector<1x18x1x4xf32>
    tpu.vector_store %arg6[%c0_15, %c0_16, %c0_17, %c0_18], %22 {strides = array<i32>} : memref<1x18x18x4xf32, #tpu.memory_space<vmem>>, vector<1x18x1x4xf32>,
    %cst_19 = arith.constant 0.000000e+00 : f32
    %23 = vector.broadcast %cst_19 : f32 to vector<18x1x4xf32>
    %c0_20 = arith.constant 0 : index
    %c0_21 = arith.constant 0 : index
    %c17_22 = arith.constant 17 : index
    %c0_23 = arith.constant 0 : index
    %24 = vector.load %arg6[%c0_20, %c0_21, %c17_22, %c0_23] : memref<1x18x18x4xf32, #tpu.memory_space<vmem>>, vector<1x18x1x4xf32>
    %25 = vector.shape_cast %24 : vector<1x18x1x4xf32> to vector<18x1x4xf32>
    %26 = vector.shape_cast %23 : vector<18x1x4xf32> to vector<1x18x1x4xf32>
    tpu.vector_store %arg6[%c0_20, %c0_21, %c17_22, %c0_23], %26 {strides = array<i32>} : memref<1x18x18x4xf32, #tpu.memory_space<vmem>>, vector<1x18x1x4xf32>,
    %27 = vector.shape_cast %10 : vector<256x4xf32> to vector<16x16x4xf32>
    %c0_24 = arith.constant 0 : index
    %c1 = arith.constant 1 : index
    %c1_25 = arith.constant 1 : index
    %c0_26 = arith.constant 0 : index
    %28 = vector.load %arg6[%c0_24, %c1, %c1_25, %c0_26] : memref<1x18x18x4xf32, #tpu.memory_space<vmem>>, vector<1x16x16x4xf32>
    %29 = vector.shape_cast %28 : vector<1x16x16x4xf32> to vector<16x16x4xf32>
    %30 = vector.shape_cast %27 : vector<16x16x4xf32> to vector<1x16x16x4xf32>
    tpu.vector_store %arg6[%c0_24, %c1, %c1_25, %c0_26], %30 {strides = array<i32>} : memref<1x18x18x4xf32, #tpu.memory_space<vmem>>, vector<1x16x16x4xf32>,
    %c0_27 = arith.constant 0 : index
    %c0_28 = arith.constant 0 : index
    %c0_29 = arith.constant 0 : index
    %c0_30 = arith.constant 0 : index
    %31 = vector.load %arg6[%c0_27, %c0_28, %c0_29, %c0_30] : memref<1x18x18x4xf32, #tpu.memory_space<vmem>>, vector<1x16x16x4xf32>
    %32 = vector.shape_cast %31 : vector<1x16x16x4xf32> to vector<16x16x4xf32>
    %33 = vector.shape_cast %32 : vector<16x16x4xf32> to vector<256x4xf32>
    %c0_31 = arith.constant 0 : index
    %c0_32 = arith.constant 0 : index
    %c1_33 = arith.constant 1 : index
    %c0_34 = arith.constant 0 : index
    %34 = vector.load %arg6[%c0_31, %c0_32, %c1_33, %c0_34] : memref<1x18x18x4xf32, #tpu.memory_space<vmem>>, vector<1x16x16x4xf32>
    %35 = vector.shape_cast %34 : vector<1x16x16x4xf32> to vector<16x16x4xf32>
    %36 = vector.shape_cast %35 : vector<16x16x4xf32> to vector<256x4xf32>
    %c0_35 = arith.constant 0 : index
    %c0_36 = arith.constant 0 : index
    %c2 = arith.constant 2 : index
    %c0_37 = arith.constant 0 : index
    %37 = vector.load %arg6[%c0_35, %c0_36, %c2, %c0_37] : memref<1x18x18x4xf32, #tpu.memory_space<vmem>>, vector<1x16x16x4xf32>
    %38 = vector.shape_cast %37 : vector<1x16x16x4xf32> to vector<16x16x4xf32>
    %39 = vector.shape_cast %38 : vector<16x16x4xf32> to vector<256x4xf32>
    %c0_38 = arith.constant 0 : index
    %c1_39 = arith.constant 1 : index
    %c0_40 = arith.constant 0 : index
    %c0_41 = arith.constant 0 : index
    %40 = vector.load %arg6[%c0_38, %c1_39, %c0_40, %c0_41] : memref<1x18x18x4xf32, #tpu.memory_space<vmem>>, vector<1x16x16x4xf32>
    %41 = vector.shape_cast %40 : vector<1x16x16x4xf32> to vector<16x16x4xf32>
    %42 = vector.shape_cast %41 : vector<16x16x4xf32> to vector<256x4xf32>
    %c0_42 = arith.constant 0 : index
    %c1_43 = arith.constant 1 : index
    %c1_44 = arith.constant 1 : index
    %c0_45 = arith.constant 0 : index
    %43 = vector.load %arg6[%c0_42, %c1_43, %c1_44, %c0_45] : memref<1x18x18x4xf32, #tpu.memory_space<vmem>>, vector<1x16x16x4xf32>
    %44 = vector.shape_cast %43 : vector<1x16x16x4xf32> to vector<16x16x4xf32>
    %45 = vector.shape_cast %44 : vector<16x16x4xf32> to vector<256x4xf32>
    %c0_46 = arith.constant 0 : index
    %c1_47 = arith.constant 1 : index
    %c2_48 = arith.constant 2 : index
    %c0_49 = arith.constant 0 : index
    %46 = vector.load %arg6[%c0_46, %c1_47, %c2_48, %c0_49] : memref<1x18x18x4xf32, #tpu.memory_space<vmem>>, vector<1x16x16x4xf32>
    %47 = vector.shape_cast %46 : vector<1x16x16x4xf32> to vector<16x16x4xf32>
    %48 = vector.shape_cast %47 : vector<16x16x4xf32> to vector<256x4xf32>
    %c0_50 = arith.constant 0 : index
    %c2_51 = arith.constant 2 : index
    %c0_52 = arith.constant 0 : index
    %c0_53 = arith.constant 0 : index
    %49 = vector.load %arg6[%c0_50, %c2_51, %c0_52, %c0_53] : memref<1x18x18x4xf32, #tpu.memory_space<vmem>>, vector<1x16x16x4xf32>
    %50 = vector.shape_cast %49 : vector<1x16x16x4xf32> to vector<16x16x4xf32>
    %51 = vector.shape_cast %50 : vector<16x16x4xf32> to vector<256x4xf32>
    %c0_54 = arith.constant 0 : index
    %c2_55 = arith.constant 2 : index
    %c1_56 = arith.constant 1 : index
    %c0_57 = arith.constant 0 : index
    %52 = vector.load %arg6[%c0_54, %c2_55, %c1_56, %c0_57] : memref<1x18x18x4xf32, #tpu.memory_space<vmem>>, vector<1x16x16x4xf32>
    %53 = vector.shape_cast %52 : vector<1x16x16x4xf32> to vector<16x16x4xf32>
    %54 = vector.shape_cast %53 : vector<16x16x4xf32> to vector<256x4xf32>
    %c0_58 = arith.constant 0 : index
    %c2_59 = arith.constant 2 : index
    %c2_60 = arith.constant 2 : index
    %c0_61 = arith.constant 0 : index
    %55 = vector.load %arg6[%c0_58, %c2_59, %c2_60, %c0_61] : memref<1x18x18x4xf32, #tpu.memory_space<vmem>>, vector<1x16x16x4xf32>
    %56 = vector.shape_cast %55 : vector<1x16x16x4xf32> to vector<16x16x4xf32>
    %57 = vector.shape_cast %56 : vector<16x16x4xf32> to vector<256x4xf32>
    %58 = tpu.concatenate %33, %36, %39, %42, %45, %48, %51, %54, %57 in 1 : vector<256x4xf32>, vector<256x4xf32>, vector<256x4xf32>, vector<256x4xf32>, vector<256x4xf32>, vector<256x4xf32>, vector<256x4xf32>, vector<256x4xf32>, vector<256x4xf32> -> vector<256x36xf32>
    %59 = arith.truncf %58 : vector<256x36xf32> to vector<256x36xbf16>
    %c0_62 = arith.constant 0 : index
    %c0_63 = arith.constant 0 : index
    %60 = vector.load %arg3[%c0_62, %c0_63] : memref<36x4xbf16, #tpu.memory_space<vmem>>, vector<36x4xbf16>
    %cst_64 = arith.constant dense<0.000000e+00> : vector<256x4xf32>
    %61 = tpu.matmul %59, %60, %cst_64 {dimension_numbers = #tpu.dot_dimension_numbers<[1], [0], [0], [1], [0, 0, 1, 1], [], []>} : vector<256x36xbf16>, vector<36x4xbf16>, vector<256x4xf32> -> vector<256x4xf32>
    %62 = vector.shape_cast %61 : vector<256x4xf32> to vector<1x16x16x4xf32>
    %63 = arith.truncf %62 : vector<1x16x16x4xf32> to vector<1x16x16x4xbf16>
    %c0_65 = arith.constant 0 : index
    %c0_66 = arith.constant 0 : index
    %c0_67 = arith.constant 0 : index
    %c0_68 = arith.constant 0 : index
    %64 = vector.load %arg4[%c0_65, %c0_66, %c0_67, %c0_68] : memref<1x16x16x4xbf16, #tpu.memory_space<vmem>>, vector<1x16x16x4xbf16>
    tpu.vector_store %arg4[%c0_65, %c0_66, %c0_67, %c0_68], %63 {strides = array<i32>} : memref<1x16x16x4xbf16, #tpu.memory_space<vmem>>, vector<1x16x16x4xbf16>,
    %cst_69 = arith.constant dense<0.000000e+00> : vector<4xf32>
    %65 = vector.multi_reduction <add>, %61, %cst_69 [0] : vector<256x4xf32> to vector<4xf32>
    %66 = vector.shape_cast %65 : vector<4xf32> to vector<1x4xf32>
    %67 = arith.mulf %61, %61 : vector<256x4xf32>
    %cst_70 = arith.constant dense<0.000000e+00> : vector<4xf32>
    %68 = vector.multi_reduction <add>, %67, %cst_70 [0] : vector<256x4xf32> to vector<4xf32>
    %69 = vector.shape_cast %68 : vector<4xf32> to vector<1x4xf32>
    %70 = tpu.concatenate %66, %69 in 0 : vector<1x4xf32>, vector<1x4xf32> -> vector<2x4xf32>
    %71 = vector.shape_cast %70 : vector<2x4xf32> to vector<1x2x4xf32>
    %c0_71 = arith.constant 0 : index
    %c0_72 = arith.constant 0 : index
    %c0_73 = arith.constant 0 : index
    %72 = vector.load %arg5[%c0_71, %c0_72, %c0_73] : memref<1x2x4xf32, #tpu.memory_space<vmem>>, vector<1x2x4xf32>
    tpu.vector_store %arg5[%c0_71, %c0_72, %c0_73], %71 {strides = array<i32>} : memref<1x2x4xf32, #tpu.memory_space<vmem>>, vector<1x2x4xf32>,
    return
  }
  func.func @transform_0(%arg0: i32) -> (i32, i32, i32, i32) {
    %c0_i32 = arith.constant 0 : i32
    %c0_i32_0 = arith.constant 0 : i32
    %c0_i32_1 = arith.constant 0 : i32
    %c0_i32_2 = arith.constant 0 : i32
    return %arg0, %c0_i32, %c0_i32_0, %c0_i32_1 : i32, i32, i32, i32
  }
  func.func @transform_1(%arg0: i32) -> (i32, i32) {
    %c0_i32 = arith.constant 0 : i32
    %c0_i32_0 = arith.constant 0 : i32
    %c0_i32_1 = arith.constant 0 : i32
    return %c0_i32, %c0_i32_0 : i32, i32
  }
  func.func @transform_2(%arg0: i32) -> (i32, i32) {
    %c0_i32 = arith.constant 0 : i32
    %c0_i32_0 = arith.constant 0 : i32
    %c0_i32_1 = arith.constant 0 : i32
    return %c0_i32, %c0_i32_0 : i32, i32
  }
  func.func @transform_3(%arg0: i32) -> (i32, i32, i32, i32) {
    %c0_i32 = arith.constant 0 : i32
    %c0_i32_0 = arith.constant 0 : i32
    %c0_i32_1 = arith.constant 0 : i32
    %c0_i32_2 = arith.constant 0 : i32
    return %arg0, %c0_i32, %c0_i32_0, %c0_i32_1 : i32, i32, i32, i32
  }
  func.func @transform_4(%arg0: i32) -> (i32, i32, i32) {
    %c0_i32 = arith.constant 0 : i32
    %c0_i32_0 = arith.constant 0 : i32
    %c0_i32_1 = arith.constant 0 : i32
    return %arg0, %c0_i32, %c0_i32_0 : i32, i32, i32
  }
}

</mosaic_0001>

<llo_original>
// kernel: tpu_custom_call.1
$region0: #{tpu_custom_call.1}
  #allocation0 [shape = 'u32[]', space=smem, size = 0x4, offset = 0x4, fixed_abs, tag = 'smem constant byte address 0x4 - core index']
  #allocation1 [shape = 'u32[144,128]{1,0:T(1,128)}', space=vmem, size = 0x12000, scoped, tag = 'internal scratch']
  #allocation2 [shape = 'f32[1,18,18,4]{3,2,1,0:T(8,128)}', space=vmem, size = 0x36000, scoped, tag = 'scratch operand']
  %s0 = inlined_call_operand.vmem [shape: f32[2,16,16,4], index: 0, kind: input, shape index: {}]
  %s1 = inlined_call_operand.vmem [shape: f32[2,4], index: 1, kind: input, shape index: {}]
  %s2 = inlined_call_operand.vmem [shape: bf16[36,4], index: 2, kind: input, shape index: {}]
  %s3 = inlined_call_operand.vmem [shape: bf16[2,16,16,4], index: 3, kind: output, shape index: {0}]
  %s4 = inlined_call_operand.hbm [shape: f32[2,2,4], index: 4, kind: output, shape index: {1}]
  %5 = xla_tuple %s3, %s4
  %s6 = sld [smem:[#allocation0]]
  $region53: #{tpu_custom_call.1} parent=0
    _
  %s8 = ssub.s32 1, %s6
  %s9 = scalar_select 0, %s8, %s6
  $region1: #{tpu_custom_call.1} parent=0
    #allocation3 [shape = 'u8[2048]{0}', space=vmem, size = 0x800, scoped, tag = 'output window, operand 1']
    #allocation4 [shape = 's32[2]{0}', space=sflag, size = 0x8, scoped, tag = 'scoped memory for tpu_custom_call.1']
    %10 = vsyncpa [#allocation4], 0
    %s11 = scalar_lea.sflag [#allocation4], 1
    %12 = vsyncpa %s11, 0
    loop: start=0, step=1, limit=4
    $region2: #{tpu_custom_call.1} parent=1 // loop_pre_header
      _
    $region3: #{tpu_custom_call.1} parent=1 // loop_header
      %s14 = sphi 0, %s18
      %p15 = scmp.ge.s32.totalorder %s14, 4
      %s24 = sphi 0, %s26
      %s27 = sphi 0, %s24
      %s28 = sphi 0, %s27
      %s44 = sphi 0, %s28
      %s48 = sphi 0, %s48
      %s50 = sphi 0, %s48
      %s51 = sphi 0, %s50
      %s65 = sphi 0, %s51
      %s69 = sphi 0, %s69
      %s71 = sphi 0, %s69
      %s72 = sphi 0, %s71
      %s86 = sphi 0, %s72
      %s92 = sphi 0, %s94
      %s95 = sphi 0, %s92
      %s96 = sphi 0, %s95
      %s112 = sphi 0, %s96
      %s118 = sphi 0, %s120
      %s121 = sphi 0, %s118
      %s122 = sphi 0, %s121
      %s138 = sphi 0, %s122
    $region4: #{tpu_custom_call.1} parent=1 // loop_header_branch
      %17 = sbr.rel (%p15) target = $region8
    $region5: #{tpu_custom_call.1} parent=1 // loop_body
      %s19 = ssub.s32 %s14, 1
      %s20 = ssub.s32 %s14, 2
      %s21 = sadd.s32 %s14, 1
      %s22 = ssub.s32 %s14, %s21
      %p23 = scmp.eq.s32.totalorder %s22, 0
      %s25 = sadd.s32 %s24, 1
      %s26 = scalar_select %p23, %s24, %s25
      %p29 = pneg %p23
      %p30 = scmp.eq.s32.totalorder %s14, 1
      %p31 = por %p29, %p30
      %p32 = scmp.ne.s32.totalorder %s24, %s27
      %p33 = scmp.eq.s32.totalorder %s14, 0
      %p34 = por %p32, %p33
      %p35 = scmp.ne.s32.totalorder %s24, %s27
      %p36 = scmp.eq.s32.totalorder %s19, 1
      %p37 = por %p35, %p36
      %p38 = scmp.ne.s32.totalorder %s27, %s28
      %p39 = scmp.eq.s32.totalorder %s19, 0
      %p40 = por %p38, %p39
      %p41 = scmp.ne.s32.totalorder %s27, %s28
      %p42 = scmp.eq.s32.totalorder %s20, 1
      %p43 = por %p41, %p42
      %p45 = scmp.ne.s32.totalorder %s28, %s44
      %p46 = scmp.eq.s32.totalorder %s20, 0
      %p47 = por %p45, %p46
      %s49 = sadd.s32 %s48, 1
      %p52 = scmp.eq.s32.totalorder %s14, 1
      %p53 = scmp.ne.s32.totalorder %s48, %s50
      %p54 = scmp.eq.s32.totalorder %s14, 0
      %p55 = por %p53, %p54
      %p56 = scmp.ne.s32.totalorder %s48, %s50
      %p57 = scmp.eq.s32.totalorder %s19, 1
      %p58 = por %p56, %p57
      %p59 = scmp.ne.s32.totalorder %s50, %s51
      %p60 = scmp.eq.s32.totalorder %s19, 0
      %p61 = por %p59, %p60
      %p62 = scmp.ne.s32.totalorder %s50, %s51
      %p63 = scmp.eq.s32.totalorder %s20, 1
      %p64 = por %p62, %p63
      %p66 = scmp.ne.s32.totalorder %s51, %s65
      %p67 = scmp.eq.s32.totalorder %s20, 0
      %p68 = por %p66, %p67
      %s70 = sadd.s32 %s69, 1
      %p73 = scmp.eq.s32.totalorder %s14, 1
      %p74 = scmp.ne.s32.totalorder %s69, %s71
      %p75 = scmp.eq.s32.totalorder %s14, 0
      %p76 = por %p74, %p75
      %p77 = scmp.ne.s32.totalorder %s69, %s71
      %p78 = scmp.eq.s32.totalorder %s19, 1
      %p79 = por %p77, %p78
      %p80 = scmp.ne.s32.totalorder %s71, %s72
      %p81 = scmp.eq.s32.totalorder %s19, 0
      %p82 = por %p80, %p81
      %p83 = scmp.ne.s32.totalorder %s71, %s72
      %p84 = scmp.eq.s32.totalorder %s20, 1
      %p85 = por %p83, %p84
      %p87 = scmp.ne.s32.totalorder %s72, %s86
      %p88 = scmp.eq.s32.totalorder %s20, 0
      %p89 = por %p87, %p88
      %s90 = ssub.s32 %s14, %s21
      %p91 = scmp.eq.s32.totalorder %s90, 0
      %s93 = sadd.s32 %s92, 1
      %s94 = scalar_select %p91, %s92, %s93
      %p97 = pneg %p91
      %p98 = scmp.eq.s32.totalorder %s14, 1
      %p99 = por %p97, %p98
      %p100 = scmp.ne.s32.totalorder %s92, %s95
      %p101 = scmp.eq.s32.totalorder %s14, 0
      %p102 = por %p100, %p101
      %p103 = scmp.ne.s32.totalorder %s92, %s95
      %p104 = scmp.eq.s32.totalorder %s19, 1
      %p105 = por %p103, %p104
      %p106 = scmp.ne.s32.totalorder %s95, %s96
      %p107 = scmp.eq.s32.totalorder %s19, 0
      %p108 = por %p106, %p107
      %p109 = scmp.ne.s32.totalorder %s95, %s96
      %p110 = scmp.eq.s32.totalorder %s20, 1
      %p111 = por %p109, %p110
      %p113 = scmp.ne.s32.totalorder %s96, %s112
      %p114 = scmp.eq.s32.totalorder %s20, 0
      %p115 = por %p113, %p114
      %s116 = ssub.s32 %s14, %s21
      %p117 = scmp.eq.s32.totalorder %s116, 0
      %s119 = sadd.s32 %s118, 1
      %s120 = scalar_select %p117, %s118, %s119
      %p123 = pneg %p117
      %p124 = scmp.eq.s32.totalorder %s14, 1
      %p125 = por %p123, %p124
      %p126 = scmp.ne.s32.totalorder %s118, %s121
      %p127 = scmp.eq.s32.totalorder %s14, 0
      %p128 = por %p126, %p127
      %p129 = scmp.ne.s32.totalorder %s118, %s121
      %p130 = scmp.eq.s32.totalorder %s19, 1
      %p131 = por %p129, %p130
      %p132 = scmp.ne.s32.totalorder %s121, %s122
      %p133 = scmp.eq.s32.totalorder %s19, 0
      %p134 = por %p132, %p133
      %p135 = scmp.ne.s32.totalorder %s121, %s122
      %p136 = scmp.eq.s32.totalorder %s20, 1
      %p137 = por %p135, %p136
      %p139 = scmp.ne.s32.totalorder %s122, %s138
      %p140 = scmp.eq.s32.totalorder %s20, 0
      %p141 = por %p139, %p140
      %p142 = scmp.le.s32.totalorder 1, %s14
      %p143 = scmp.lt.s32.totalorder %s14, 3
      %p144 = pnand %p142, %p143
      %p145 = pneg %p144
      // Predicated region
      $region9: #{tpu_custom_call.1} parent=5 // pred_check
        _
      $region10: #{tpu_custom_call.1} parent=5 // pred_check_branch
        %147 = sbr.rel (%p144) target = $region12
      $region11: #{tpu_custom_call.1} parent=5 // pred_region
        %s148 = ssub.s32 %s14, 1
        // Predicated region
        $region13: #{tpu_custom_call.1} parent=11 // pred_check
          %p149 = pneg %p61
        $region14: #{tpu_custom_call.1} parent=11 // pred_check_branch
          %151 = sbr.rel (%p149) target = $region16
        $region15: #{tpu_custom_call.1} parent=11 // pred_region
          _
        $region16: #{tpu_custom_call.1} parent=11 // pred_fallthru
          _
        // Predicated region
        $region17: #{tpu_custom_call.1} parent=11 // pred_check
          %p152 = pneg %p82
        $region18: #{tpu_custom_call.1} parent=11 // pred_check_branch
          %154 = sbr.rel (%p152) target = $region20
        $region19: #{tpu_custom_call.1} parent=11 // pred_region
          _
        $region20: #{tpu_custom_call.1} parent=11 // pred_fallthru
          _
      $region12: #{tpu_custom_call.1} parent=5 // pred_fallthru
        _
      %p155 = scmp.lt.s32.totalorder %s14, 2
      // Predicated region
      $region21: #{tpu_custom_call.1} parent=5 // pred_check
        %p156 = pneg %p155
      $region22: #{tpu_custom_call.1} parent=5 // pred_check_branch
        %158 = sbr.rel (%p156) target = $region24
      $region23: #{tpu_custom_call.1} parent=5 // pred_region
        // Predicated region
        $region25: #{tpu_custom_call.1} parent=23 // pred_check
          %p159 = pneg %p34
        $region26: #{tpu_custom_call.1} parent=23 // pred_check_branch
          %161 = sbr.rel (%p159) target = $region28
        $region27: #{tpu_custom_call.1} parent=23 // pred_region
          %p162 = scmp.lt.s32.totalorder %s14, 1
          %s163 = scalar_select %p162, %s14, 1
          %s164 = smul.addr %s163, 32
          %s165 = smul.addr %s164, 8
          %s166 = scalar_lea.vmem %s0, %s165
        $region28: #{tpu_custom_call.1} parent=23 // pred_fallthru
          _
      $region24: #{tpu_custom_call.1} parent=5 // pred_fallthru
        _
      %p167 = scmp.le.s32.totalorder 1, %s14
      %p168 = scmp.lt.s32.totalorder %s14, 3
      %p169 = pnand %p167, %p168
      %p170 = pneg %p169
      // Predicated region
      $region29: #{tpu_custom_call.1} parent=5 // pred_check
        _
      $region30: #{tpu_custom_call.1} parent=5 // pred_check_branch
        %172 = sbr.rel (%p169) target = $region32
      $region31: #{tpu_custom_call.1} parent=5 // pred_region
        %s173 = ssub.s32 %s14, 1
        %p174 = scmp.lt.s32.totalorder %s19, 1
        %s175 = scalar_select %p174, %s19, 1
        %s176 = smul.addr %s175, 32
        %s177 = smul.addr %s176, 8
        %s178 = scalar_lea.vmem %s0, %s177
        %p179 = pneg %p40
        %p180 = pneg %p37
        %p181 = pneg %p61
        %p182 = pneg %p58
        %p183 = pneg %p82
        %p184 = pneg %p79
        %p185 = pneg %p108
        %p186 = pneg %p105
        %p187 = scmp.lt.s32.totalorder %s19, 1
        %s188 = scalar_select %p187, %s19, 1
        %s189 = smul.addr %s188, 32
        %s190 = smul.addr %s189, 4
        %s191 = scalar_lea.vmem %s3, %s190
        %p192 = pneg %p134
        %p193 = pneg %p131
        %s194 = sand.u32 %s121, 1
        %s195 = scalar_lea.sflag [#allocation4], %s194
        %s196 = sand.u32 %s121, 1
        %s197 = smul.addr %s196, 2
        %s198 = scalar_lea.vmem [#allocation3], %s197
        %p199 = scmp.lt.s32.totalorder %s19, 1
        %s200 = scalar_select %p199, %s19, 1
        %s201 = smul.addr %s200, 32
        %s202 = smul.addr %s201, 8
        %s203 = scalar_lea.vmem %s0, %s202
        %p204 = scmp.lt.s32.totalorder %s19, 1
        %s205 = scalar_select %p204, %s19, 1
        %s206 = smul.addr %s205, 32
        %s207 = smul.addr %s206, 4
        %s208 = scalar_lea.vmem %s3, %s207
        %v210 = vld [vmem:[%s203] sm:$0xff]
        %v211 = vld [vmem:[%s203 + $0x8] sm:$0xff]
        %v212 = vld [vmem:[%s203 + $0x10] sm:$0xff]
        %v213 = vld [vmem:[%s203 + $0x18] sm:$0xff]
        %v214 = vld [vmem:[%s203 + $0x20] sm:$0xff]
        %v215 = vld [vmem:[%s203 + $0x28] sm:$0xff]
        %v216 = vld [vmem:[%s203 + $0x30] sm:$0xff]
        %v217 = vld [vmem:[%s203 + $0x38] sm:$0xff]
        %v218 = vld [vmem:[%s203 + $0x40] sm:$0xff]
        %v219 = vld [vmem:[%s203 + $0x48] sm:$0xff]
        %v220 = vld [vmem:[%s203 + $0x50] sm:$0xff]
        %v221 = vld [vmem:[%s203 + $0x58] sm:$0xff]
        %v222 = vld [vmem:[%s203 + $0x60] sm:$0xff]
        %v223 = vld [vmem:[%s203 + $0x68] sm:$0xff]
        %v224 = vld [vmem:[%s203 + $0x70] sm:$0xff]
        %v225 = vld [vmem:[%s203 + $0x78] sm:$0xff]
        %v226 = vld [vmem:[%s203 + $0x80] sm:$0xff]
        %v227 = vld [vmem:[%s203 + $0x88] sm:$0xff]
        %v228 = vld [vmem:[%s203 + $0x90] sm:$0xff]
        %v229 = vld [vmem:[%s203 + $0x98] sm:$0xff]
        %v230 = vld [vmem:[%s203 + $0xa0] sm:$0xff]
        %v231 = vld [vmem:[%s203 + $0xa8] sm:$0xff]
        %v232 = vld [vmem:[%s203 + $0xb0] sm:$0xff]
        %v233 = vld [vmem:[%s203 + $0xb8] sm:$0xff]
        %v234 = vld [vmem:[%s203 + $0xc0] sm:$0xff]
        %v235 = vld [vmem:[%s203 + $0xc8] sm:$0xff]
        %v236 = vld [vmem:[%s203 + $0xd0] sm:$0xff]
        %v237 = vld [vmem:[%s203 + $0xd8] sm:$0xff]
        %v238 = vld [vmem:[%s203 + $0xe0] sm:$0xff]
        %v239 = vld [vmem:[%s203 + $0xe8] sm:$0xff]
        %v240 = vld [vmem:[%s203 + $0xf0] sm:$0xff]
        %v241 = vld [vmem:[%s203 + $0xf8] sm:$0xff]
        %v242 = vld [vmem:[%s1] sm:$0x3]
        %v243 = vlaneseq
        %v244 = vshrl.u32 %v243, 7
        %v245 = vsub.s32 0, %v244
        %v246 = vrot.slane %v242, %v245
        %v247 = vmul.f32 %v210, %v246
        %v248 = vmul.f32 %v211, %v246
        %v249 = vmul.f32 %v212, %v246
        %v250 = vmul.f32 %v213, %v246
        %v251 = vmul.f32 %v214, %v246
        %v252 = vmul.f32 %v215, %v246
        %v253 = vmul.f32 %v216, %v246
        %v254 = vmul.f32 %v217, %v246
        %v255 = vmul.f32 %v218, %v246
        %v256 = vmul.f32 %v219, %v246
        %v257 = vmul.f32 %v220, %v246
        %v258 = vmul.f32 %v221, %v246
        %v259 = vmul.f32 %v222, %v246
        %v260 = vmul.f32 %v223, %v246
        %v261 = vmul.f32 %v224, %v246
        %v262 = vmul.f32 %v225, %v246
        %v263 = vmul.f32 %v226, %v246
        %v264 = vmul.f32 %v227, %v246
        %v265 = vmul.f32 %v228, %v246
        %v266 = vmul.f32 %v229, %v246
        %v267 = vmul.f32 %v230, %v246
        %v268 = vmul.f32 %v231, %v246
        %v269 = vmul.f32 %v232, %v246
        %v270 = vmul.f32 %v233, %v246
        %v271 = vmul.f32 %v234, %v246
        %v272 = vmul.f32 %v235, %v246
        %v273 = vmul.f32 %v236, %v246
        %v274 = vmul.f32 %v237, %v246
        %v275 = vmul.f32 %v238, %v246
        %v276 = vmul.f32 %v239, %v246
        %v277 = vmul.f32 %v240, %v246
        %v278 = vmul.f32 %v241, %v246
        %v279 = vlaneseq
        %v280 = vshrl.u32 %v279, 7
        %v281 = vsub.s32 1, %v280
        %v282 = vrot.slane %v242, %v281
        %v283 = vadd.f32 %v247, %v282
        %v284 = vadd.f32 %v248, %v282
        %v285 = vadd.f32 %v249, %v282
        %v286 = vadd.f32 %v250, %v282
        %v287 = vadd.f32 %v251, %v282
        %v288 = vadd.f32 %v252, %v282
        %v289 = vadd.f32 %v253, %v282
        %v290 = vadd.f32 %v254, %v282
        %v291 = vadd.f32 %v255, %v282
        %v292 = vadd.f32 %v256, %v282
        %v293 = vadd.f32 %v257, %v282
        %v294 = vadd.f32 %v258, %v282
        %v295 = vadd.f32 %v259, %v282
        %v296 = vadd.f32 %v260, %v282
        %v297 = vadd.f32 %v261, %v282
        %v298 = vadd.f32 %v262, %v282
        %v299 = vadd.f32 %v263, %v282
        %v300 = vadd.f32 %v264, %v282
        %v301 = vadd.f32 %v265, %v282
        %v302 = vadd.f32 %v266, %v282
        %v303 = vadd.f32 %v267, %v282
        %v304 = vadd.f32 %v268, %v282
        %v305 = vadd.f32 %v269, %v282
        %v306 = vadd.f32 %v270, %v282
        %v307 = vadd.f32 %v271, %v282
        %v308 = vadd.f32 %v272, %v282
        %v309 = vadd.f32 %v273, %v282
        %v310 = vadd.f32 %v274, %v282
        %v311 = vadd.f32 %v275, %v282
        %v312 = vadd.f32 %v276, %v282
        %v313 = vadd.f32 %v277, %v282
        %v314 = vadd.f32 %v278, %v282
        %v315 = vmax.f32 %v283, 0.0
        %v316 = vmax.f32 %v284, 0.0
        %v317 = vmax.f32 %v285, 0.0
        %v318 = vmax.f32 %v286, 0.0
        %v319 = vmax.f32 %v287, 0.0
        %v320 = vmax.f32 %v288, 0.0
        %v321 = vmax.f32 %v289, 0.0
        %v322 = vmax.f32 %v290, 0.0
        %v323 = vmax.f32 %v291, 0.0
        %v324 = vmax.f32 %v292, 0.0
        %v325 = vmax.f32 %v293, 0.0
        %v326 = vmax.f32 %v294, 0.0
        %v327 = vmax.f32 %v295, 0.0
        %v328 = vmax.f32 %v296, 0.0
        %v329 = vmax.f32 %v297, 0.0
        %v330 = vmax.f32 %v298, 0.0
        %v331 = vmax.f32 %v299, 0.0
        %v332 = vmax.f32 %v300, 0.0
        %v333 = vmax.f32 %v301, 0.0
        %v334 = vmax.f32 %v302, 0.0
        %v335 = vmax.f32 %v303, 0.0
        %v336 = vmax.f32 %v304, 0.0
        %v337 = vmax.f32 %v305, 0.0
        %v338 = vmax.f32 %v306, 0.0
        %v339 = vmax.f32 %v307, 0.0
        %v340 = vmax.f32 %v308, 0.0
        %v341 = vmax.f32 %v309, 0.0
        %v342 = vmax.f32 %v310, 0.0
        %v343 = vmax.f32 %v311, 0.0
        %v344 = vmax.f32 %v312, 0.0
        %v345 = vmax.f32 %v313, 0.0
        %v346 = vmax.f32 %v314, 0.0
        %vm347 = vcmask 31744
        %348 = vst.msk [vmem:[#allocation2] sm:$0xff] %vm347, 0.0
        %349 = vst.msk [vmem:[#allocation2 + $0x8] sm:$0xff] %vm347, 0.0
        %vm350 = vcmask 25600
        %351 = vst.msk [vmem:[#allocation2 + $0x10] sm:$0x3] %vm350, 0.0
        %s352 = scalar_lea.vmem [#allocation2], 408
        %353 = vst.msk [vmem:[%s352] sm:$0xff] %vm347, 0.0
        %354 = vst.msk [vmem:[%s352 + $0x8] sm:$0xff] %vm347, 0.0
        %355 = vst.msk [vmem:[%s352 + $0x10] sm:$0x3] %vm350, 0.0
        %vm356 = vcmask 24576
        %357 = vst.msk [vmem:[#allocation2] sm:$0x1] %vm356, 0.0
        %358 = vst.msk [vmem:[#allocation2 + $0x18] sm:$0x1] %vm356, 0.0
        %359 = vst.msk [vmem:[#allocation2 + $0x30] sm:$0x1] %vm356, 0.0
        %360 = vst.msk [vmem:[#allocation2 + $0x48] sm:$0x1] %vm356, 0.0
        %361 = vst.msk [vmem:[#allocation2 + $0x60] sm:$0x1] %vm356, 0.0
        %362 = vst.msk [vmem:[#allocation2 + $0x78] sm:$0x1] %vm356, 0.0
        %363 = vst.msk [vmem:[#allocation2 + $0x90] sm:$0x1] %vm356, 0.0
        %364 = vst.msk [vmem:[#allocation2 + $0xa8] sm:$0x1] %vm356, 0.0
        %365 = vst.msk [vmem:[#allocation2 + $0xc0] sm:$0x1] %vm356, 0.0
        %366 = vst.msk [vmem:[#allocation2 + $0xd8] sm:$0x1] %vm356, 0.0
        %367 = vst.msk [vmem:[#allocation2 + $0xf0] sm:$0x1] %vm356, 0.0
        %368 = vst.msk [vmem:[#allocation2 + $0x108] sm:$0x1] %vm356, 0.0
        %369 = vst.msk [vmem:[#allocation2 + $0x120] sm:$0x1] %vm356, 0.0
        %370 = vst.msk [vmem:[#allocation2 + $0x138] sm:$0x1] %vm356, 0.0
        %371 = vst.msk [vmem:[#allocation2 + $0x150] sm:$0x1] %vm356, 0.0
        %372 = vst.msk [vmem:[#allocation2 + $0x168] sm:$0x1] %vm356, 0.0
        %373 = vst.msk [vmem:[#allocation2 + $0x180] sm:$0x1] %vm356, 0.0
        %374 = vst.msk [vmem:[#allocation2 + $0x198] sm:$0x1] %vm356, 0.0
        %375 = vst.msk [vmem:[#allocation2 + $0x11] sm:$0x1] %vm356, 0.0
        %376 = vst.msk [vmem:[#allocation2 + $0x29] sm:$0x1] %vm356, 0.0
        %377 = vst.msk [vmem:[#allocation2 + $0x41] sm:$0x1] %vm356, 0.0
        %378 = vst.msk [vmem:[#allocation2 + $0x59] sm:$0x1] %vm356, 0.0
        %379 = vst.msk [vmem:[#allocation2 + $0x71] sm:$0x1] %vm356, 0.0
        %380 = vst.msk [vmem:[#allocation2 + $0x89] sm:$0x1] %vm356, 0.0
        %381 = vst.msk [vmem:[#allocation2 + $0xa1] sm:$0x1] %vm356, 0.0
        %382 = vst.msk [vmem:[#allocation2 + $0xb9] sm:$0x1] %vm356, 0.0
        %383 = vst.msk [vmem:[#allocation2 + $0xd1] sm:$0x1] %vm356, 0.0
        %384 = vst.msk [vmem:[#allocation2 + $0xe9] sm:$0x1] %vm356, 0.0
        %385 = vst.msk [vmem:[#allocation2 + $0x101] sm:$0x1] %vm356, 0.0
        %386 = vst.msk [vmem:[#allocation2 + $0x119] sm:$0x1] %vm356, 0.0
        %387 = vst.msk [vmem:[#allocation2 + $0x131] sm:$0x1] %vm356, 0.0
        %388 = vst.msk [vmem:[#allocation2 + $0x149] sm:$0x1] %vm356, 0.0
        %389 = vst.msk [vmem:[#allocation2 + $0x161] sm:$0x1] %vm356, 0.0
        %390 = vst.msk [vmem:[#allocation2 + $0x179] sm:$0x1] %vm356, 0.0
        %391 = vst.msk [vmem:[#allocation2 + $0x191] sm:$0x1] %vm356, 0.0
        %392 = vst.msk [vmem:[#allocation2 + $0x1a9] sm:$0x1] %vm356, 0.0
        %s393 = scalar_lea.vmem [#allocation2], 24
        %394 = vst.msk [vmem:[%s393 + $0x1] sm:$0xff] %vm347, %v315
        %395 = vst.msk [vmem:[%s393 + $0x9] sm:$0xff] %vm347, %v316
        %396 = vst.msk [vmem:[%s393 + $0x19] sm:$0xff] %vm347, %v317
        %397 = vst.msk [vmem:[%s393 + $0x21] sm:$0xff] %vm347, %v318
        %398 = vst.msk [vmem:[%s393 + $0x31] sm:$0xff] %vm347, %v319
        %399 = vst.msk [vmem:[%s393 + $0x39] sm:$0xff] %vm347, %v320
        %400 = vst.msk [vmem:[%s393 + $0x49] sm:$0xff] %vm347, %v321
        %401 = vst.msk [vmem:[%s393 + $0x51] sm:$0xff] %vm347, %v322
        %402 = vst.msk [vmem:[%s393 + $0x61] sm:$0xff] %vm347, %v323
        %403 = vst.msk [vmem:[%s393 + $0x69] sm:$0xff] %vm347, %v324
        %404 = vst.msk [vmem:[%s393 + $0x79] sm:$0xff] %vm347, %v325
        %405 = vst.msk [vmem:[%s393 + $0x81] sm:$0xff] %vm347, %v326
        %406 = vst.msk [vmem:[%s393 + $0x91] sm:$0xff] %vm347, %v327
        %407 = vst.msk [vmem:[%s393 + $0x99] sm:$0xff] %vm347, %v328
        %408 = vst.msk [vmem:[%s393 + $0xa9] sm:$0xff] %vm347, %v329
        %409 = vst.msk [vmem:[%s393 + $0xb1] sm:$0xff] %vm347, %v330
        %410 = vst.msk [vmem:[%s393 + $0xc1] sm:$0xff] %vm347, %v331
        %411 = vst.msk [vmem:[%s393 + $0xc9] sm:$0xff] %vm347, %v332
        %412 = vst.msk [vmem:[%s393 + $0xd9] sm:$0xff] %vm347, %v333
        %413 = vst.msk [vmem:[%s393 + $0xe1] sm:$0xff] %vm347, %v334
        %414 = vst.msk [vmem:[%s393 + $0xf1] sm:$0xff] %vm347, %v335
        %415 = vst.msk [vmem:[%s393 + $0xf9] sm:$0xff] %vm347, %v336
        %416 = vst.msk [vmem:[%s393 + $0x109] sm:$0xff] %vm347, %v337
        %417 = vst.msk [vmem:[%s393 + $0x111] sm:$0xff] %vm347, %v338
        %418 = vst.msk [vmem:[%s393 + $0x121] sm:$0xff] %vm347, %v339
        %419 = vst.msk [vmem:[%s393 + $0x129] sm:$0xff] %vm347, %v340
        %420 = vst.msk [vmem:[%s393 + $0x139] sm:$0xff] %vm347, %v341
        %421 = vst.msk [vmem:[%s393 + $0x141] sm:$0xff] %vm347, %v342
        %422 = vst.msk [vmem:[%s393 + $0x151] sm:$0xff] %vm347, %v343
        %423 = vst.msk [vmem:[%s393 + $0x159] sm:$0xff] %vm347, %v344
        %424 = vst.msk [vmem:[%s393 + $0x169] sm:$0xff] %vm347, %v345
        %425 = vst.msk [vmem:[%s393 + $0x171] sm:$0xff] %vm347, %v346
        %v426 = vld [vmem:[#allocation2] sm:$0xff]
        %v427 = vld [vmem:[#allocation2 + $0x8] sm:$0xff]
        %v428 = vld [vmem:[#allocation2 + $0x18] sm:$0xff]
        %v429 = vld [vmem:[#allocation2 + $0x20] sm:$0xff]
        %v430 = vld [vmem:[#allocation2 + $0x30] sm:$0xff]
        %v431 = vld [vmem:[#allocation2 + $0x38] sm:$0xff]
        %v432 = vld [vmem:[#allocation2 + $0x48] sm:$0xff]
        %v433 = vld [vmem:[#allocation2 + $0x50] sm:$0xff]
        %v434 = vld [vmem:[#allocation2 + $0x60] sm:$0xff]
        %v435 = vld [vmem:[#allocation2 + $0x68] sm:$0xff]
        %v436 = vld [vmem:[#allocation2 + $0x78] sm:$0xff]
        %v437 = vld [vmem:[#allocation2 + $0x80] sm:$0xff]
        %v438 = vld [vmem:[#allocation2 + $0x90] sm:$0xff]
        %v439 = vld [vmem:[#allocation2 + $0x98] sm:$0xff]
        %v440 = vld [vmem:[#allocation2 + $0xa8] sm:$0xff]
        %v441 = vld [vmem:[#allocation2 + $0xb0] sm:$0xff]
        %v442 = vld [vmem:[#allocation2 + $0xc0] sm:$0xff]
        %v443 = vld [vmem:[#allocation2 + $0xc8] sm:$0xff]
        %v444 = vld [vmem:[#allocation2 + $0xd8] sm:$0xff]
        %v445 = vld [vmem:[#allocation2 + $0xe0] sm:$0xff]
        %v446 = vld [vmem:[#allocation2 + $0xf0] sm:$0xff]
        %v447 = vld [vmem:[#allocation2 + $0xf8] sm:$0xff]
        %v448 = vld [vmem:[#allocation2 + $0x108] sm:$0xff]
        %v449 = vld [vmem:[#allocation2 + $0x110] sm:$0xff]
        %v450 = vld [vmem:[#allocation2 + $0x120] sm:$0xff]
        %v451 = vld [vmem:[#allocation2 + $0x128] sm:$0xff]
        %v452 = vld [vmem:[#allocation2 + $0x138] sm:$0xff]
        %v453 = vld [vmem:[#allocation2 + $0x140] sm:$0xff]
        %v454 = vld [vmem:[#allocation2 + $0x150] sm:$0xff]
        %v455 = vld [vmem:[#allocation2 + $0x158] sm:$0xff]
        %v456 = vld [vmem:[#allocation2 + $0x168] sm:$0xff]
        %v457 = vld [vmem:[#allocation2 + $0x170] sm:$0xff]
        %v458 = vld [vmem:[#allocation2 + $0x1] sm:$0xff]
        %v459 = vld [vmem:[#allocation2 + $0x9] sm:$0xff]
        %v460 = vld [vmem:[#allocation2 + $0x19] sm:$0xff]
        %v461 = vld [vmem:[#allocation2 + $0x21] sm:$0xff]
        %v462 = vld [vmem:[#allocation2 + $0x31] sm:$0xff]
        %v463 = vld [vmem:[#allocation2 + $0x39] sm:$0xff]
        %v464 = vld [vmem:[#allocation2 + $0x49] sm:$0xff]
        %v465 = vld [vmem:[#allocation2 + $0x51] sm:$0xff]
        %v466 = vld [vmem:[#allocation2 + $0x61] sm:$0xff]
        %v467 = vld [vmem:[#allocation2 + $0x69] sm:$0xff]
        %v468 = vld [vmem:[#allocation2 + $0x79] sm:$0xff]
        %v469 = vld [vmem:[#allocation2 + $0x81] sm:$0xff]
        %v470 = vld [vmem:[#allocation2 + $0x91] sm:$0xff]
        %v471 = vld [vmem:[#allocation2 + $0x99] sm:$0xff]
        %v472 = vld [vmem:[#allocation2 + $0xa9] sm:$0xff]
        %v473 = vld [vmem:[#allocation2 + $0xb1] sm:$0xff]
        %v474 = vld [vmem:[#allocation2 + $0xc1] sm:$0xff]
        %v475 = vld [vmem:[#allocation2 + $0xc9] sm:$0xff]
        %v476 = vld [vmem:[#allocation2 + $0xd9] sm:$0xff]
        %v477 = vld [vmem:[#allocation2 + $0xe1] sm:$0xff]
        %v478 = vld [vmem:[#allocation2 + $0xf1] sm:$0xff]
        %v479 = vld [vmem:[#allocation2 + $0xf9] sm:$0xff]
        %v480 = vld [vmem:[#allocation2 + $0x109] sm:$0xff]
        %v481 = vld [vmem:[#allocation2 + $0x111] sm:$0xff]
        %v482 = vld [vmem:[#allocation2 + $0x121] sm:$0xff]
        %v483 = vld [vmem:[#allocation2 + $0x129] sm:$0xff]
        %v484 = vld [vmem:[#allocation2 + $0x139] sm:$0xff]
        %v485 = vld [vmem:[#allocation2 + $0x141] sm:$0xff]
        %v486 = vld [vmem:[#allocation2 + $0x151] sm:$0xff]
        %v487 = vld [vmem:[#allocation2 + $0x159] sm:$0xff]
        %v488 = vld [vmem:[#allocation2 + $0x169] sm:$0xff]
        %v489 = vld [vmem:[#allocation2 + $0x171] sm:$0xff]
        %v490 = vld [vmem:[#allocation2 + $0x2] sm:$0xff]
        %v491 = vld [vmem:[#allocation2 + $0xa] sm:$0xff]
        %v492 = vld [vmem:[#allocation2 + $0x1a] sm:$0xff]
        %v493 = vld [vmem:[#allocation2 + $0x22] sm:$0xff]
        %v494 = vld [vmem:[#allocation2 + $0x32] sm:$0xff]
        %v495 = vld [vmem:[#allocation2 + $0x3a] sm:$0xff]
        %v496 = vld [vmem:[#allocation2 + $0x4a] sm:$0xff]
        %v497 = vld [vmem:[#allocation2 + $0x52] sm:$0xff]
        %v498 = vld [vmem:[#allocation2 + $0x62] sm:$0xff]
        %v499 = vld [vmem:[#allocation2 + $0x6a] sm:$0xff]
        %v500 = vld [vmem:[#allocation2 + $0x7a] sm:$0xff]
        %v501 = vld [vmem:[#allocation2 + $0x82] sm:$0xff]
        %v502 = vld [vmem:[#allocation2 + $0x92] sm:$0xff]
        %v503 = vld [vmem:[#allocation2 + $0x9a] sm:$0xff]
        %v504 = vld [vmem:[#allocation2 + $0xaa] sm:$0xff]
        %v505 = vld [vmem:[#allocation2 + $0xb2] sm:$0xff]
        %v506 = vld [vmem:[#allocation2 + $0xc2] sm:$0xff]
        %v507 = vld [vmem:[#allocation2 + $0xca] sm:$0xff]
        %v508 = vld [vmem:[#allocation2 + $0xda] sm:$0xff]
        %v509 = vld [vmem:[#allocation2 + $0xe2] sm:$0xff]
        %v510 = vld [vmem:[#allocation2 + $0xf2] sm:$0xff]
        %v511 = vld [vmem:[#allocation2 + $0xfa] sm:$0xff]
        %v512 = vld [vmem:[#allocation2 + $0x10a] sm:$0xff]
        %v513 = vld [vmem:[#allocation2 + $0x112] sm:$0xff]
        %v514 = vld [vmem:[#allocation2 + $0x122] sm:$0xff]
        %v515 = vld [vmem:[#allocation2 + $0x12a] sm:$0xff]
        %v516 = vld [vmem:[#allocation2 + $0x13a] sm:$0xff]
        %v517 = vld [vmem:[#allocation2 + $0x142] sm:$0xff]
        %v518 = vld [vmem:[#allocation2 + $0x152] sm:$0xff]
        %v519 = vld [vmem:[#allocation2 + $0x15a] sm:$0xff]
        %v520 = vld [vmem:[#allocation2 + $0x16a] sm:$0xff]
        %v521 = vld [vmem:[#allocation2 + $0x172] sm:$0xff]
        %v522 = vld [vmem:[%s393] sm:$0xff]
        %v523 = vld [vmem:[%s393 + $0x8] sm:$0xff]
        %v524 = vld [vmem:[%s393 + $0x18] sm:$0xff]
        %v525 = vld [vmem:[%s393 + $0x20] sm:$0xff]
        %v526 = vld [vmem:[%s393 + $0x30] sm:$0xff]
        %v527 = vld [vmem:[%s393 + $0x38] sm:$0xff]
        %v528 = vld [vmem:[%s393 + $0x48] sm:$0xff]
        %v529 = vld [vmem:[%s393 + $0x50] sm:$0xff]
        %v530 = vld [vmem:[%s393 + $0x60] sm:$0xff]
        %v531 = vld [vmem:[%s393 + $0x68] sm:$0xff]
        %v532 = vld [vmem:[%s393 + $0x78] sm:$0xff]
        %v533 = vld [vmem:[%s393 + $0x80] sm:$0xff]
        %v534 = vld [vmem:[%s393 + $0x90] sm:$0xff]
        %v535 = vld [vmem:[%s393 + $0x98] sm:$0xff]
        %v536 = vld [vmem:[%s393 + $0xa8] sm:$0xff]
        %v537 = vld [vmem:[%s393 + $0xb0] sm:$0xff]
        %v538 = vld [vmem:[%s393 + $0xc0] sm:$0xff]
        %v539 = vld [vmem:[%s393 + $0xc8] sm:$0xff]
        %v540 = vld [vmem:[%s393 + $0xd8] sm:$0xff]
        %v541 = vld [vmem:[%s393 + $0xe0] sm:$0xff]
        %v542 = vld [vmem:[%s393 + $0xf0] sm:$0xff]
        %v543 = vld [vmem:[%s393 + $0xf8] sm:$0xff]
        %v544 = vld [vmem:[%s393 + $0x108] sm:$0xff]
        %v545 = vld [vmem:[%s393 + $0x110] sm:$0xff]
        %v546 = vld [vmem:[%s393 + $0x120] sm:$0xff]
        %v547 = vld [vmem:[%s393 + $0x128] sm:$0xff]
        %v548 = vld [vmem:[%s393 + $0x138] sm:$0xff]
        %v549 = vld [vmem:[%s393 + $0x140] sm:$0xff]
        %v550 = vld [vmem:[%s393 + $0x150] sm:$0xff]
        %v551 = vld [vmem:[%s393 + $0x158] sm:$0xff]
        %v552 = vld [vmem:[%s393 + $0x168] sm:$0xff]
        %v553 = vld [vmem:[%s393 + $0x170] sm:$0xff]
        %v554 = vld [vmem:[%s393 + $0x1] sm:$0xff]
        %v555 = vld [vmem:[%s393 + $0x9] sm:$0xff]
        %v556 = vld [vmem:[%s393 + $0x19] sm:$0xff]
        %v557 = vld [vmem:[%s393 + $0x21] sm:$0xff]
        %v558 = vld [vmem:[%s393 + $0x31] sm:$0xff]
        %v559 = vld [vmem:[%s393 + $0x39] sm:$0xff]
        %v560 = vld [vmem:[%s393 + $0x49] sm:$0xff]
        %v561 = vld [vmem:[%s393 + $0x51] sm:$0xff]
        %v562 = vld [vmem:[%s393 + $0x61] sm:$0xff]
        %v563 = vld [vmem:[%s393 + $0x69] sm:$0xff]
        %v564 = vld [vmem:[%s393 + $0x79] sm:$0xff]
        %v565 = vld [vmem:[%s393 + $0x81] sm:$0xff]
        %v566 = vld [vmem:[%s393 + $0x91] sm:$0xff]
        %v567 = vld [vmem:[%s393 + $0x99] sm:$0xff]
        %v568 = vld [vmem:[%s393 + $0xa9] sm:$0xff]
        %v569 = vld [vmem:[%s393 + $0xb1] sm:$0xff]
        %v570 = vld [vmem:[%s393 + $0xc1] sm:$0xff]
        %v571 = vld [vmem:[%s393 + $0xc9] sm:$0xff]
        %v572 = vld [vmem:[%s393 + $0xd9] sm:$0xff]
        %v573 = vld [vmem:[%s393 + $0xe1] sm:$0xff]
        %v574 = vld [vmem:[%s393 + $0xf1] sm:$0xff]
        %v575 = vld [vmem:[%s393 + $0xf9] sm:$0xff]
        %v576 = vld [vmem:[%s393 + $0x109] sm:$0xff]
        %v577 = vld [vmem:[%s393 + $0x111] sm:$0xff]
        %v578 = vld [vmem:[%s393 + $0x121] sm:$0xff]
        %v579 = vld [vmem:[%s393 + $0x129] sm:$0xff]
        %v580 = vld [vmem:[%s393 + $0x139] sm:$0xff]
        %v581 = vld [vmem:[%s393 + $0x141] sm:$0xff]
        %v582 = vld [vmem:[%s393 + $0x151] sm:$0xff]
        %v583 = vld [vmem:[%s393 + $0x159] sm:$0xff]
        %v584 = vld [vmem:[%s393 + $0x169] sm:$0xff]
        %v585 = vld [vmem:[%s393 + $0x171] sm:$0xff]
        %v586 = vld [vmem:[%s393 + $0x2] sm:$0xff]
        %v587 = vld [vmem:[%s393 + $0xa] sm:$0xff]
        %v588 = vld [vmem:[%s393 + $0x1a] sm:$0xff]
        %v589 = vld [vmem:[%s393 + $0x22] sm:$0xff]
        %v590 = vld [vmem:[%s393 + $0x32] sm:$0xff]
        %v591 = vld [vmem:[%s393 + $0x3a] sm:$0xff]
        %v592 = vld [vmem:[%s393 + $0x4a] sm:$0xff]
        %v593 = vld [vmem:[%s393 + $0x52] sm:$0xff]
        %v594 = vld [vmem:[%s393 + $0x62] sm:$0xff]
        %v595 = vld [vmem:[%s393 + $0x6a] sm:$0xff]
        %v596 = vld [vmem:[%s393 + $0x7a] sm:$0xff]
        %v597 = vld [vmem:[%s393 + $0x82] sm:$0xff]
        %v598 = vld [vmem:[%s393 + $0x92] sm:$0xff]
        %v599 = vld [vmem:[%s393 + $0x9a] sm:$0xff]
        %v600 = vld [vmem:[%s393 + $0xaa] sm:$0xff]
        %v601 = vld [vmem:[%s393 + $0xb2] sm:$0xff]
        %v602 = vld [vmem:[%s393 + $0xc2] sm:$0xff]
        %v603 = vld [vmem:[%s393 + $0xca] sm:$0xff]
        %v604 = vld [vmem:[%s393 + $0xda] sm:$0xff]
        %v605 = vld [vmem:[%s393 + $0xe2] sm:$0xff]
        %v606 = vld [vmem:[%s393 + $0xf2] sm:$0xff]
        %v607 = vld [vmem:[%s393 + $0xfa] sm:$0xff]
        %v608 = vld [vmem:[%s393 + $0x10a] sm:$0xff]
        %v609 = vld [vmem:[%s393 + $0x112] sm:$0xff]
        %v610 = vld [vmem:[%s393 + $0x122] sm:$0xff]
        %v611 = vld [vmem:[%s393 + $0x12a] sm:$0xff]
        %v612 = vld [vmem:[%s393 + $0x13a] sm:$0xff]
        %v613 = vld [vmem:[%s393 + $0x142] sm:$0xff]
        %v614 = vld [vmem:[%s393 + $0x152] sm:$0xff]
        %v615 = vld [vmem:[%s393 + $0x15a] sm:$0xff]
        %v616 = vld [vmem:[%s393 + $0x16a] sm:$0xff]
        %v617 = vld [vmem:[%s393 + $0x172] sm:$0xff]
        %s618 = scalar_lea.vmem [#allocation2], 48
        %v619 = vld [vmem:[%s618] sm:$0xff]
        %v620 = vld [vmem:[%s618 + $0x8] sm:$0xff]
        %v621 = vld [vmem:[%s618 + $0x18] sm:$0xff]
        %v622 = vld [vmem:[%s618 + $0x20] sm:$0xff]
        %v623 = vld [vmem:[%s618 + $0x30] sm:$0xff]
        %v624 = vld [vmem:[%s618 + $0x38] sm:$0xff]
        %v625 = vld [vmem:[%s618 + $0x48] sm:$0xff]
        %v626 = vld [vmem:[%s618 + $0x50] sm:$0xff]
        %v627 = vld [vmem:[%s618 + $0x60] sm:$0xff]
        %v628 = vld [vmem:[%s618 + $0x68] sm:$0xff]
        %v629 = vld [vmem:[%s618 + $0x78] sm:$0xff]
        %v630 = vld [vmem:[%s618 + $0x80] sm:$0xff]
        %v631 = vld [vmem:[%s618 + $0x90] sm:$0xff]
        %v632 = vld [vmem:[%s618 + $0x98] sm:$0xff]
        %v633 = vld [vmem:[%s618 + $0xa8] sm:$0xff]
        %v634 = vld [vmem:[%s618 + $0xb0] sm:$0xff]
        %v635 = vld [vmem:[%s618 + $0xc0] sm:$0xff]
        %v636 = vld [vmem:[%s618 + $0xc8] sm:$0xff]
        %v637 = vld [vmem:[%s618 + $0xd8] sm:$0xff]
        %v638 = vld [vmem:[%s618 + $0xe0] sm:$0xff]
        %v639 = vld [vmem:[%s618 + $0xf0] sm:$0xff]
        %v640 = vld [vmem:[%s618 + $0xf8] sm:$0xff]
        %v641 = vld [vmem:[%s618 + $0x108] sm:$0xff]
        %v642 = vld [vmem:[%s618 + $0x110] sm:$0xff]
        %v643 = vld [vmem:[%s618 + $0x120] sm:$0xff]
        %v644 = vld [vmem:[%s618 + $0x128] sm:$0xff]
        %v645 = vld [vmem:[%s618 + $0x138] sm:$0xff]
        %v646 = vld [vmem:[%s618 + $0x140] sm:$0xff]
        %v647 = vld [vmem:[%s618 + $0x150] sm:$0xff]
        %v648 = vld [vmem:[%s618 + $0x158] sm:$0xff]
        %v649 = vld [vmem:[%s618 + $0x168] sm:$0xff]
        %v650 = vld [vmem:[%s618 + $0x170] sm:$0xff]
        %v651 = vld [vmem:[%s618 + $0x1] sm:$0xff]
        %v652 = vld [vmem:[%s618 + $0x9] sm:$0xff]
        %v653 = vld [vmem:[%s618 + $0x19] sm:$0xff]
        %v654 = vld [vmem:[%s618 + $0x21] sm:$0xff]
        %v655 = vld [vmem:[%s618 + $0x31] sm:$0xff]
        %v656 = vld [vmem:[%s618 + $0x39] sm:$0xff]
        %v657 = vld [vmem:[%s618 + $0x49] sm:$0xff]
        %v658 = vld [vmem:[%s618 + $0x51] sm:$0xff]
        %v659 = vld [vmem:[%s618 + $0x61] sm:$0xff]
        %v660 = vld [vmem:[%s618 + $0x69] sm:$0xff]
        %v661 = vld [vmem:[%s618 + $0x79] sm:$0xff]
        %v662 = vld [vmem:[%s618 + $0x81] sm:$0xff]
        %v663 = vld [vmem:[%s618 + $0x91] sm:$0xff]
        %v664 = vld [vmem:[%s618 + $0x99] sm:$0xff]
        %v665 = vld [vmem:[%s618 + $0xa9] sm:$0xff]
        %v666 = vld [vmem:[%s618 + $0xb1] sm:$0xff]
        %v667 = vld [vmem:[%s618 + $0xc1] sm:$0xff]
        %v668 = vld [vmem:[%s618 + $0xc9] sm:$0xff]
        %v669 = vld [vmem:[%s618 + $0xd9] sm:$0xff]
        %v670 = vld [vmem:[%s618 + $0xe1] sm:$0xff]
        %v671 = vld [vmem:[%s618 + $0xf1] sm:$0xff]
        %v672 = vld [vmem:[%s618 + $0xf9] sm:$0xff]
        %v673 = vld [vmem:[%s618 + $0x109] sm:$0xff]
        %v674 = vld [vmem:[%s618 + $0x111] sm:$0xff]
        %v675 = vld [vmem:[%s618 + $0x121] sm:$0xff]
        %v676 = vld [vmem:[%s618 + $0x129] sm:$0xff]
        %v677 = vld [vmem:[%s618 + $0x139] sm:$0xff]
        %v678 = vld [vmem:[%s618 + $0x141] sm:$0xff]
        %v679 = vld [vmem:[%s618 + $0x151] sm:$0xff]
        %v680 = vld [vmem:[%s618 + $0x159] sm:$0xff]
        %v681 = vld [vmem:[%s618 + $0x169] sm:$0xff]
        %v682 = vld [vmem:[%s618 + $0x171] sm:$0xff]
        %v683 = vld [vmem:[%s618 + $0x2] sm:$0xff]
        %v684 = vld [vmem:[%s618 + $0xa] sm:$0xff]
        %v685 = vld [vmem:[%s618 + $0x1a] sm:$0xff]
        %v686 = vld [vmem:[%s618 + $0x22] sm:$0xff]
        %v687 = vld [vmem:[%s618 + $0x32] sm:$0xff]
        %v688 = vld [vmem:[%s618 + $0x3a] sm:$0xff]
        %v689 = vld [vmem:[%s618 + $0x4a] sm:$0xff]
        %v690 = vld [vmem:[%s618 + $0x52] sm:$0xff]
        %v691 = vld [vmem:[%s618 + $0x62] sm:$0xff]
        %v692 = vld [vmem:[%s618 + $0x6a] sm:$0xff]
        %v693 = vld [vmem:[%s618 + $0x7a] sm:$0xff]
        %v694 = vld [vmem:[%s618 + $0x82] sm:$0xff]
        %v695 = vld [vmem:[%s618 + $0x92] sm:$0xff]
        %v696 = vld [vmem:[%s618 + $0x9a] sm:$0xff]
        %v697 = vld [vmem:[%s618 + $0xaa] sm:$0xff]
        %v698 = vld [vmem:[%s618 + $0xb2] sm:$0xff]
        %v699 = vld [vmem:[%s618 + $0xc2] sm:$0xff]
        %v700 = vld [vmem:[%s618 + $0xca] sm:$0xff]
        %v701 = vld [vmem:[%s618 + $0xda] sm:$0xff]
        %v702 = vld [vmem:[%s618 + $0xe2] sm:$0xff]
        %v703 = vld [vmem:[%s618 + $0xf2] sm:$0xff]
        %v704 = vld [vmem:[%s618 + $0xfa] sm:$0xff]
        %v705 = vld [vmem:[%s618 + $0x10a] sm:$0xff]
        %v706 = vld [vmem:[%s618 + $0x112] sm:$0xff]
        %v707 = vld [vmem:[%s618 + $0x122] sm:$0xff]
        %v708 = vld [vmem:[%s618 + $0x12a] sm:$0xff]
        %v709 = vld [vmem:[%s618 + $0x13a] sm:$0xff]
        %v710 = vld [vmem:[%s618 + $0x142] sm:$0xff]
        %v711 = vld [vmem:[%s618 + $0x152] sm:$0xff]
        %v712 = vld [vmem:[%s618 + $0x15a] sm:$0xff]
        %v713 = vld [vmem:[%s618 + $0x16a] sm:$0xff]
        %v714 = vld [vmem:[%s618 + $0x172] sm:$0xff]
        %747 = vrot.lane.b32.xlu0 %v458, 4
        %v748 = vpop.permute.xlu0 %747
        %749 = vrot.lane.b32.xlu0 %v459, 4
        %v750 = vpop.permute.xlu0 %749
        %751 = vrot.lane.b32.xlu0 %v460, 4
        %v752 = vpop.permute.xlu0 %751
        %753 = vrot.lane.b32.xlu0 %v461, 4
        %v754 = vpop.permute.xlu0 %753
        %755 = vrot.lane.b32.xlu0 %v462, 4
        %v756 = vpop.permute.xlu0 %755
        %757 = vrot.lane.b32.xlu0 %v463, 4
        %v758 = vpop.permute.xlu0 %757
        %759 = vrot.lane.b32.xlu0 %v464, 4
        %v760 = vpop.permute.xlu0 %759
        %761 = vrot.lane.b32.xlu0 %v465, 4
        %v762 = vpop.permute.xlu0 %761
        %763 = vrot.lane.b32.xlu0 %v466, 4
        %v764 = vpop.permute.xlu0 %763
        %765 = vrot.lane.b32.xlu0 %v467, 4
        %v766 = vpop.permute.xlu0 %765
        %767 = vrot.lane.b32.xlu0 %v468, 4
        %v768 = vpop.permute.xlu0 %767
        %769 = vrot.lane.b32.xlu0 %v469, 4
        %v770 = vpop.permute.xlu0 %769
        %771 = vrot.lane.b32.xlu0 %v470, 4
        %v772 = vpop.permute.xlu0 %771
        %773 = vrot.lane.b32.xlu0 %v471, 4
        %v774 = vpop.permute.xlu0 %773
        %775 = vrot.lane.b32.xlu0 %v472, 4
        %v776 = vpop.permute.xlu0 %775
        %777 = vrot.lane.b32.xlu0 %v473, 4
        %v778 = vpop.permute.xlu0 %777
        %779 = vrot.lane.b32.xlu0 %v474, 4
        %v780 = vpop.permute.xlu0 %779
        %781 = vrot.lane.b32.xlu0 %v475, 4
        %v782 = vpop.permute.xlu0 %781
        %783 = vrot.lane.b32.xlu0 %v476, 4
        %v784 = vpop.permute.xlu0 %783
        %785 = vrot.lane.b32.xlu0 %v477, 4
        %v786 = vpop.permute.xlu0 %785
        %787 = vrot.lane.b32.xlu0 %v478, 4
        %v788 = vpop.permute.xlu0 %787
        %789 = vrot.lane.b32.xlu0 %v479, 4
        %v790 = vpop.permute.xlu0 %789
        %791 = vrot.lane.b32.xlu0 %v480, 4
        %v792 = vpop.permute.xlu0 %791
        %793 = vrot.lane.b32.xlu0 %v481, 4
        %v794 = vpop.permute.xlu0 %793
        %795 = vrot.lane.b32.xlu0 %v482, 4
        %v796 = vpop.permute.xlu0 %795
        %797 = vrot.lane.b32.xlu0 %v483, 4
        %v798 = vpop.permute.xlu0 %797
        %799 = vrot.lane.b32.xlu0 %v484, 4
        %v800 = vpop.permute.xlu0 %799
        %801 = vrot.lane.b32.xlu0 %v485, 4
        %v802 = vpop.permute.xlu0 %801
        %803 = vrot.lane.b32.xlu0 %v486, 4
        %v804 = vpop.permute.xlu0 %803
        %805 = vrot.lane.b32.xlu0 %v487, 4
        %v806 = vpop.permute.xlu0 %805
        %807 = vrot.lane.b32.xlu0 %v488, 4
        %v808 = vpop.permute.xlu0 %807
        %809 = vrot.lane.b32.xlu0 %v489, 4
        %v810 = vpop.permute.xlu0 %809
        %875 = vrot.lane.b32.xlu0 %v490, 8
        %v876 = vpop.permute.xlu0 %875
        %877 = vrot.lane.b32.xlu0 %v491, 8
        %v878 = vpop.permute.xlu0 %877
        %879 = vrot.lane.b32.xlu0 %v492, 8
        %v880 = vpop.permute.xlu0 %879
        %881 = vrot.lane.b32.xlu0 %v493, 8
        %v882 = vpop.permute.xlu0 %881
        %883 = vrot.lane.b32.xlu0 %v494, 8
        %v884 = vpop.permute.xlu0 %883
        %885 = vrot.lane.b32.xlu0 %v495, 8
        %v886 = vpop.permute.xlu0 %885
        %887 = vrot.lane.b32.xlu0 %v496, 8
        %v888 = vpop.permute.xlu0 %887
        %889 = vrot.lane.b32.xlu0 %v497, 8
        %v890 = vpop.permute.xlu0 %889
        %891 = vrot.lane.b32.xlu0 %v498, 8
        %v892 = vpop.permute.xlu0 %891
        %893 = vrot.lane.b32.xlu0 %v499, 8
        %v894 = vpop.permute.xlu0 %893
        %895 = vrot.lane.b32.xlu0 %v500, 8
        %v896 = vpop.permute.xlu0 %895
        %897 = vrot.lane.b32.xlu0 %v501, 8
        %v898 = vpop.permute.xlu0 %897
        %899 = vrot.lane.b32.xlu0 %v502, 8
        %v900 = vpop.permute.xlu0 %899
        %901 = vrot.lane.b32.xlu0 %v503, 8
        %v902 = vpop.permute.xlu0 %901
        %903 = vrot.lane.b32.xlu0 %v504, 8
        %v904 = vpop.permute.xlu0 %903
        %905 = vrot.lane.b32.xlu0 %v505, 8
        %v906 = vpop.permute.xlu0 %905
        %907 = vrot.lane.b32.xlu0 %v506, 8
        %v908 = vpop.permute.xlu0 %907
        %909 = vrot.lane.b32.xlu0 %v507, 8
        %v910 = vpop.permute.xlu0 %909
        %911 = vrot.lane.b32.xlu0 %v508, 8
        %v912 = vpop.permute.xlu0 %911
        %913 = vrot.lane.b32.xlu0 %v509, 8
        %v914 = vpop.permute.xlu0 %913
        %915 = vrot.lane.b32.xlu0 %v510, 8
        %v916 = vpop.permute.xlu0 %915
        %917 = vrot.lane.b32.xlu0 %v511, 8
        %v918 = vpop.permute.xlu0 %917
        %919 = vrot.lane.b32.xlu0 %v512, 8
        %v920 = vpop.permute.xlu0 %919
        %921 = vrot.lane.b32.xlu0 %v513, 8
        %v922 = vpop.permute.xlu0 %921
        %923 = vrot.lane.b32.xlu0 %v514, 8
        %v924 = vpop.permute.xlu0 %923
        %925 = vrot.lane.b32.xlu0 %v515, 8
        %v926 = vpop.permute.xlu0 %925
        %927 = vrot.lane.b32.xlu0 %v516, 8
        %v928 = vpop.permute.xlu0 %927
        %929 = vrot.lane.b32.xlu0 %v517, 8
        %v930 = vpop.permute.xlu0 %929
        %931 = vrot.lane.b32.xlu0 %v518, 8
        %v932 = vpop.permute.xlu0 %931
        %933 = vrot.lane.b32.xlu0 %v519, 8
        %v934 = vpop.permute.xlu0 %933
        %935 = vrot.lane.b32.xlu0 %v520, 8
        %v936 = vpop.permute.xlu0 %935
        %937 = vrot.lane.b32.xlu0 %v521, 8
        %v938 = vpop.permute.xlu0 %937
        %1003 = vrot.lane.b32.xlu0 %v522, 12
        %v1004 = vpop.permute.xlu0 %1003
        %1005 = vrot.lane.b32.xlu0 %v523, 12
        %v1006 = vpop.permute.xlu0 %1005
        %1007 = vrot.lane.b32.xlu0 %v524, 12
        %v1008 = vpop.permute.xlu0 %1007
        %1009 = vrot.lane.b32.xlu0 %v525, 12
        %v1010 = vpop.permute.xlu0 %1009
        %1011 = vrot.lane.b32.xlu0 %v526, 12
        %v1012 = vpop.permute.xlu0 %1011
        %1013 = vrot.lane.b32.xlu0 %v527, 12
        %v1014 = vpop.permute.xlu0 %1013
        %1015 = vrot.lane.b32.xlu0 %v528, 12
        %v1016 = vpop.permute.xlu0 %1015
        %1017 = vrot.lane.b32.xlu0 %v529, 12
        %v1018 = vpop.permute.xlu0 %1017
        %1019 = vrot.lane.b32.xlu0 %v530, 12
        %v1020 = vpop.permute.xlu0 %1019
        %1021 = vrot.lane.b32.xlu0 %v531, 12
        %v1022 = vpop.permute.xlu0 %1021
        %1023 = vrot.lane.b32.xlu0 %v532, 12
        %v1024 = vpop.permute.xlu0 %1023
        %1025 = vrot.lane.b32.xlu0 %v533, 12
        %v1026 = vpop.permute.xlu0 %1025
        %1027 = vrot.lane.b32.xlu0 %v534, 12
        %v1028 = vpop.permute.xlu0 %1027
        %1029 = vrot.lane.b32.xlu0 %v535, 12
        %v1030 = vpop.permute.xlu0 %1029
        %1031 = vrot.lane.b32.xlu0 %v536, 12
        %v1032 = vpop.permute.xlu0 %1031
        %1033 = vrot.lane.b32.xlu0 %v537, 12
        %v1034 = vpop.permute.xlu0 %1033
        %1035 = vrot.lane.b32.xlu0 %v538, 12
        %v1036 = vpop.permute.xlu0 %1035
        %1037 = vrot.lane.b32.xlu0 %v539, 12
        %v1038 = vpop.permute.xlu0 %1037
        %1039 = vrot.lane.b32.xlu0 %v540, 12
        %v1040 = vpop.permute.xlu0 %1039
        %1041 = vrot.lane.b32.xlu0 %v541, 12
        %v1042 = vpop.permute.xlu0 %1041
        %1043 = vrot.lane.b32.xlu0 %v542, 12
        %v1044 = vpop.permute.xlu0 %1043
        %1045 = vrot.lane.b32.xlu0 %v543, 12
        %v1046 = vpop.permute.xlu0 %1045
        %1047 = vrot.lane.b32.xlu0 %v544, 12
        %v1048 = vpop.permute.xlu0 %1047
        %1049 = vrot.lane.b32.xlu0 %v545, 12
        %v1050 = vpop.permute.xlu0 %1049
        %1051 = vrot.lane.b32.xlu0 %v546, 12
        %v1052 = vpop.permute.xlu0 %1051
        %1053 = vrot.lane.b32.xlu0 %v547, 12
        %v1054 = vpop.permute.xlu0 %1053
        %1055 = vrot.lane.b32.xlu0 %v548, 12
        %v1056 = vpop.permute.xlu0 %1055
        %1057 = vrot.lane.b32.xlu0 %v549, 12
        %v1058 = vpop.permute.xlu0 %1057
        %1059 = vrot.lane.b32.xlu0 %v550, 12
        %v1060 = vpop.permute.xlu0 %1059
        %1061 = vrot.lane.b32.xlu0 %v551, 12
        %v1062 = vpop.permute.xlu0 %1061
        %1063 = vrot.lane.b32.xlu0 %v552, 12
        %v1064 = vpop.permute.xlu0 %1063
        %1065 = vrot.lane.b32.xlu0 %v553, 12
        %v1066 = vpop.permute.xlu0 %1065
        %1131 = vrot.lane.b32.xlu0 %v554, 16
        %v1132 = vpop.permute.xlu0 %1131
        %1133 = vrot.lane.b32.xlu0 %v555, 16
        %v1134 = vpop.permute.xlu0 %1133
        %1135 = vrot.lane.b32.xlu0 %v556, 16
        %v1136 = vpop.permute.xlu0 %1135
        %1137 = vrot.lane.b32.xlu0 %v557, 16
        %v1138 = vpop.permute.xlu0 %1137
        %1139 = vrot.lane.b32.xlu0 %v558, 16
        %v1140 = vpop.permute.xlu0 %1139
        %1141 = vrot.lane.b32.xlu0 %v559, 16
        %v1142 = vpop.permute.xlu0 %1141
        %1143 = vrot.lane.b32.xlu0 %v560, 16
        %v1144 = vpop.permute.xlu0 %1143
        %1145 = vrot.lane.b32.xlu0 %v561, 16
        %v1146 = vpop.permute.xlu0 %1145
        %1147 = vrot.lane.b32.xlu0 %v562, 16
        %v1148 = vpop.permute.xlu0 %1147
        %1149 = vrot.lane.b32.xlu0 %v563, 16
        %v1150 = vpop.permute.xlu0 %1149
        %1151 = vrot.lane.b32.xlu0 %v564, 16
        %v1152 = vpop.permute.xlu0 %1151
        %1153 = vrot.lane.b32.xlu0 %v565, 16
        %v1154 = vpop.permute.xlu0 %1153
        %1155 = vrot.lane.b32.xlu0 %v566, 16
        %v1156 = vpop.permute.xlu0 %1155
        %1157 = vrot.lane.b32.xlu0 %v567, 16
        %v1158 = vpop.permute.xlu0 %1157
        %1159 = vrot.lane.b32.xlu0 %v568, 16
        %v1160 = vpop.permute.xlu0 %1159
        %1161 = vrot.lane.b32.xlu0 %v569, 16
        %v1162 = vpop.permute.xlu0 %1161
        %1163 = vrot.lane.b32.xlu0 %v570, 16
        %v1164 = vpop.permute.xlu0 %1163
        %1165 = vrot.lane.b32.xlu0 %v571, 16
        %v1166 = vpop.permute.xlu0 %1165
        %1167 = vrot.lane.b32.xlu0 %v572, 16
        %v1168 = vpop.permute.xlu0 %1167
        %1169 = vrot.lane.b32.xlu0 %v573, 16
        %v1170 = vpop.permute.xlu0 %1169
        %1171 = vrot.lane.b32.xlu0 %v574, 16
        %v1172 = vpop.permute.xlu0 %1171
        %1173 = vrot.lane.b32.xlu0 %v575, 16
        %v1174 = vpop.permute.xlu0 %1173
        %1175 = vrot.lane.b32.xlu0 %v576, 16
        %v1176 = vpop.permute.xlu0 %1175
        %1177 = vrot.lane.b32.xlu0 %v577, 16
        %v1178 = vpop.permute.xlu0 %1177
        %1179 = vrot.lane.b32.xlu0 %v578, 16
        %v1180 = vpop.permute.xlu0 %1179
        %1181 = vrot.lane.b32.xlu0 %v579, 16
        %v1182 = vpop.permute.xlu0 %1181
        %1183 = vrot.lane.b32.xlu0 %v580, 16
        %v1184 = vpop.permute.xlu0 %1183
        %1185 = vrot.lane.b32.xlu0 %v581, 16
        %v1186 = vpop.permute.xlu0 %1185
        %1187 = vrot.lane.b32.xlu0 %v582, 16
        %v1188 = vpop.permute.xlu0 %1187
        %1189 = vrot.lane.b32.xlu0 %v583, 16
        %v1190 = vpop.permute.xlu0 %1189
        %1191 = vrot.lane.b32.xlu0 %v584, 16
        %v1192 = vpop.permute.xlu0 %1191
        %1193 = vrot.lane.b32.xlu0 %v585, 16
        %v1194 = vpop.permute.xlu0 %1193
        %1259 = vrot.lane.b32.xlu0 %v586, 20
        %v1260 = vpop.permute.xlu0 %1259
        %1261 = vrot.lane.b32.xlu0 %v587, 20
        %v1262 = vpop.permute.xlu0 %1261
        %1263 = vrot.lane.b32.xlu0 %v588, 20
        %v1264 = vpop.permute.xlu0 %1263
        %1265 = vrot.lane.b32.xlu0 %v589, 20
        %v1266 = vpop.permute.xlu0 %1265
        %1267 = vrot.lane.b32.xlu0 %v590, 20
        %v1268 = vpop.permute.xlu0 %1267
        %1269 = vrot.lane.b32.xlu0 %v591, 20
        %v1270 = vpop.permute.xlu0 %1269
        %1271 = vrot.lane.b32.xlu0 %v592, 20
        %v1272 = vpop.permute.xlu0 %1271
        %1273 = vrot.lane.b32.xlu0 %v593, 20
        %v1274 = vpop.permute.xlu0 %1273
        %1275 = vrot.lane.b32.xlu0 %v594, 20
        %v1276 = vpop.permute.xlu0 %1275
        %1277 = vrot.lane.b32.xlu0 %v595, 20
        %v1278 = vpop.permute.xlu0 %1277
        %1279 = vrot.lane.b32.xlu0 %v596, 20
        %v1280 = vpop.permute.xlu0 %1279
        %1281 = vrot.lane.b32.xlu0 %v597, 20
        %v1282 = vpop.permute.xlu0 %1281
        %1283 = vrot.lane.b32.xlu0 %v598, 20
        %v1284 = vpop.permute.xlu0 %1283
        %1285 = vrot.lane.b32.xlu0 %v599, 20
        %v1286 = vpop.permute.xlu0 %1285
        %1287 = vrot.lane.b32.xlu0 %v600, 20
        %v1288 = vpop.permute.xlu0 %1287
        %1289 = vrot.lane.b32.xlu0 %v601, 20
        %v1290 = vpop.permute.xlu0 %1289
        %1291 = vrot.lane.b32.xlu0 %v602, 20
        %v1292 = vpop.permute.xlu0 %1291
        %1293 = vrot.lane.b32.xlu0 %v603, 20
        %v1294 = vpop.permute.xlu0 %1293
        %1295 = vrot.lane.b32.xlu0 %v604, 20
        %v1296 = vpop.permute.xlu0 %1295
        %1297 = vrot.lane.b32.xlu0 %v605, 20
        %v1298 = vpop.permute.xlu0 %1297
        %1299 = vrot.lane.b32.xlu0 %v606, 20
        %v1300 = vpop.permute.xlu0 %1299
        %1301 = vrot.lane.b32.xlu0 %v607, 20
        %v1302 = vpop.permute.xlu0 %1301
        %1303 = vrot.lane.b32.xlu0 %v608, 20
        %v1304 = vpop.permute.xlu0 %1303
        %1305 = vrot.lane.b32.xlu0 %v609, 20
        %v1306 = vpop.permute.xlu0 %1305
        %1307 = vrot.lane.b32.xlu0 %v610, 20
        %v1308 = vpop.permute.xlu0 %1307
        %1309 = vrot.lane.b32.xlu0 %v611, 20
        %v1310 = vpop.permute.xlu0 %1309
        %1311 = vrot.lane.b32.xlu0 %v612, 20
        %v1312 = vpop.permute.xlu0 %1311
        %1313 = vrot.lane.b32.xlu0 %v613, 20
        %v1314 = vpop.permute.xlu0 %1313
        %1315 = vrot.lane.b32.xlu0 %v614, 20
        %v1316 = vpop.permute.xlu0 %1315
        %1317 = vrot.lane.b32.xlu0 %v615, 20
        %v1318 = vpop.permute.xlu0 %1317
        %1319 = vrot.lane.b32.xlu0 %v616, 20
        %v1320 = vpop.permute.xlu0 %1319
        %1321 = vrot.lane.b32.xlu0 %v617, 20
        %v1322 = vpop.permute.xlu0 %1321
        %1387 = vrot.lane.b32.xlu0 %v619, 24
        %v1388 = vpop.permute.xlu0 %1387
        %1389 = vrot.lane.b32.xlu0 %v620, 24
        %v1390 = vpop.permute.xlu0 %1389
        %1391 = vrot.lane.b32.xlu0 %v621, 24
        %v1392 = vpop.permute.xlu0 %1391
        %1393 = vrot.lane.b32.xlu0 %v622, 24
        %v1394 = vpop.permute.xlu0 %1393
        %1395 = vrot.lane.b32.xlu0 %v623, 24
        %v1396 = vpop.permute.xlu0 %1395
        %1397 = vrot.lane.b32.xlu0 %v624, 24
        %v1398 = vpop.permute.xlu0 %1397
        %1399 = vrot.lane.b32.xlu0 %v625, 24
        %v1400 = vpop.permute.xlu0 %1399
        %1401 = vrot.lane.b32.xlu0 %v626, 24
        %v1402 = vpop.permute.xlu0 %1401
        %1403 = vrot.lane.b32.xlu0 %v627, 24
        %v1404 = vpop.permute.xlu0 %1403
        %1405 = vrot.lane.b32.xlu0 %v628, 24
        %v1406 = vpop.permute.xlu0 %1405
        %1407 = vrot.lane.b32.xlu0 %v629, 24
        %v1408 = vpop.permute.xlu0 %1407
        %1409 = vrot.lane.b32.xlu0 %v630, 24
        %v1410 = vpop.permute.xlu0 %1409
        %1411 = vrot.lane.b32.xlu0 %v631, 24
        %v1412 = vpop.permute.xlu0 %1411
        %1413 = vrot.lane.b32.xlu0 %v632, 24
        %v1414 = vpop.permute.xlu0 %1413
        %1415 = vrot.lane.b32.xlu0 %v633, 24
        %v1416 = vpop.permute.xlu0 %1415
        %1417 = vrot.lane.b32.xlu0 %v634, 24
        %v1418 = vpop.permute.xlu0 %1417
        %1419 = vrot.lane.b32.xlu0 %v635, 24
        %v1420 = vpop.permute.xlu0 %1419
        %1421 = vrot.lane.b32.xlu0 %v636, 24
        %v1422 = vpop.permute.xlu0 %1421
        %1423 = vrot.lane.b32.xlu0 %v637, 24
        %v1424 = vpop.permute.xlu0 %1423
        %1425 = vrot.lane.b32.xlu0 %v638, 24
        %v1426 = vpop.permute.xlu0 %1425
        %1427 = vrot.lane.b32.xlu0 %v639, 24
        %v1428 = vpop.permute.xlu0 %1427
        %1429 = vrot.lane.b32.xlu0 %v640, 24
        %v1430 = vpop.permute.xlu0 %1429
        %1431 = vrot.lane.b32.xlu0 %v641, 24
        %v1432 = vpop.permute.xlu0 %1431
        %1433 = vrot.lane.b32.xlu0 %v642, 24
        %v1434 = vpop.permute.xlu0 %1433
        %1435 = vrot.lane.b32.xlu0 %v643, 24
        %v1436 = vpop.permute.xlu0 %1435
        %1437 = vrot.lane.b32.xlu0 %v644, 24
        %v1438 = vpop.permute.xlu0 %1437
        %1439 = vrot.lane.b32.xlu0 %v645, 24
        %v1440 = vpop.permute.xlu0 %1439
        %1441 = vrot.lane.b32.xlu0 %v646, 24
        %v1442 = vpop.permute.xlu0 %1441
        %1443 = vrot.lane.b32.xlu0 %v647, 24
        %v1444 = vpop.permute.xlu0 %1443
        %1445 = vrot.lane.b32.xlu0 %v648, 24
        %v1446 = vpop.permute.xlu0 %1445
        %1447 = vrot.lane.b32.xlu0 %v649, 24
        %v1448 = vpop.permute.xlu0 %1447
        %1449 = vrot.lane.b32.xlu0 %v650, 24
        %v1450 = vpop.permute.xlu0 %1449
        %1515 = vrot.lane.b32.xlu0 %v651, 28
        %v1516 = vpop.permute.xlu0 %1515
        %1517 = vrot.lane.b32.xlu0 %v652, 28
        %v1518 = vpop.permute.xlu0 %1517
        %1519 = vrot.lane.b32.xlu0 %v653, 28
        %v1520 = vpop.permute.xlu0 %1519
        %1521 = vrot.lane.b32.xlu0 %v654, 28
        %v1522 = vpop.permute.xlu0 %1521
        %1523 = vrot.lane.b32.xlu0 %v655, 28
        %v1524 = vpop.permute.xlu0 %1523
        %1525 = vrot.lane.b32.xlu0 %v656, 28
        %v1526 = vpop.permute.xlu0 %1525
        %1527 = vrot.lane.b32.xlu0 %v657, 28
        %v1528 = vpop.permute.xlu0 %1527
        %1529 = vrot.lane.b32.xlu0 %v658, 28
        %v1530 = vpop.permute.xlu0 %1529
        %1531 = vrot.lane.b32.xlu0 %v659, 28
        %v1532 = vpop.permute.xlu0 %1531
        %1533 = vrot.lane.b32.xlu0 %v660, 28
        %v1534 = vpop.permute.xlu0 %1533
        %1535 = vrot.lane.b32.xlu0 %v661, 28
        %v1536 = vpop.permute.xlu0 %1535
        %1537 = vrot.lane.b32.xlu0 %v662, 28
        %v1538 = vpop.permute.xlu0 %1537
        %1539 = vrot.lane.b32.xlu0 %v663, 28
        %v1540 = vpop.permute.xlu0 %1539
        %1541 = vrot.lane.b32.xlu0 %v664, 28
        %v1542 = vpop.permute.xlu0 %1541
        %1543 = vrot.lane.b32.xlu0 %v665, 28
        %v1544 = vpop.permute.xlu0 %1543
        %1545 = vrot.lane.b32.xlu0 %v666, 28
        %v1546 = vpop.permute.xlu0 %1545
        %1547 = vrot.lane.b32.xlu0 %v667, 28
        %v1548 = vpop.permute.xlu0 %1547
        %1549 = vrot.lane.b32.xlu0 %v668, 28
        %v1550 = vpop.permute.xlu0 %1549
        %1551 = vrot.lane.b32.xlu0 %v669, 28
        %v1552 = vpop.permute.xlu0 %1551
        %1553 = vrot.lane.b32.xlu0 %v670, 28
        %v1554 = vpop.permute.xlu0 %1553
        %1555 = vrot.lane.b32.xlu0 %v671, 28
        %v1556 = vpop.permute.xlu0 %1555
        %1557 = vrot.lane.b32.xlu0 %v672, 28
        %v1558 = vpop.permute.xlu0 %1557
        %1559 = vrot.lane.b32.xlu0 %v673, 28
        %v1560 = vpop.permute.xlu0 %1559
        %1561 = vrot.lane.b32.xlu0 %v674, 28
        %v1562 = vpop.permute.xlu0 %1561
        %1563 = vrot.lane.b32.xlu0 %v675, 28
        %v1564 = vpop.permute.xlu0 %1563
        %1565 = vrot.lane.b32.xlu0 %v676, 28
        %v1566 = vpop.permute.xlu0 %1565
        %1567 = vrot.lane.b32.xlu0 %v677, 28
        %v1568 = vpop.permute.xlu0 %1567
        %1569 = vrot.lane.b32.xlu0 %v678, 28
        %v1570 = vpop.permute.xlu0 %1569
        %1571 = vrot.lane.b32.xlu0 %v679, 28
        %v1572 = vpop.permute.xlu0 %1571
        %1573 = vrot.lane.b32.xlu0 %v680, 28
        %v1574 = vpop.permute.xlu0 %1573
        %1575 = vrot.lane.b32.xlu0 %v681, 28
        %v1576 = vpop.permute.xlu0 %1575
        %1577 = vrot.lane.b32.xlu0 %v682, 28
        %v1578 = vpop.permute.xlu0 %1577
        %1643 = vrot.lane.b32.xlu0 %v683, 32
        %v1644 = vpop.permute.xlu0 %1643
        %1645 = vrot.lane.b32.xlu0 %v684, 32
        %v1646 = vpop.permute.xlu0 %1645
        %1647 = vrot.lane.b32.xlu0 %v685, 32
        %v1648 = vpop.permute.xlu0 %1647
        %1649 = vrot.lane.b32.xlu0 %v686, 32
        %v1650 = vpop.permute.xlu0 %1649
        %1651 = vrot.lane.b32.xlu0 %v687, 32
        %v1652 = vpop.permute.xlu0 %1651
        %1653 = vrot.lane.b32.xlu0 %v688, 32
        %v1654 = vpop.permute.xlu0 %1653
        %1655 = vrot.lane.b32.xlu0 %v689, 32
        %v1656 = vpop.permute.xlu0 %1655
        %1657 = vrot.lane.b32.xlu0 %v690, 32
        %v1658 = vpop.permute.xlu0 %1657
        %1659 = vrot.lane.b32.xlu0 %v691, 32
        %v1660 = vpop.permute.xlu0 %1659
        %1661 = vrot.lane.b32.xlu0 %v692, 32
        %v1662 = vpop.permute.xlu0 %1661
        %1663 = vrot.lane.b32.xlu0 %v693, 32
        %v1664 = vpop.permute.xlu0 %1663
        %1665 = vrot.lane.b32.xlu0 %v694, 32
        %v1666 = vpop.permute.xlu0 %1665
        %1667 = vrot.lane.b32.xlu0 %v695, 32
        %v1668 = vpop.permute.xlu0 %1667
        %1669 = vrot.lane.b32.xlu0 %v696, 32
        %v1670 = vpop.permute.xlu0 %1669
        %1671 = vrot.lane.b32.xlu0 %v697, 32
        %v1672 = vpop.permute.xlu0 %1671
        %1673 = vrot.lane.b32.xlu0 %v698, 32
        %v1674 = vpop.permute.xlu0 %1673
        %1675 = vrot.lane.b32.xlu0 %v699, 32
        %v1676 = vpop.permute.xlu0 %1675
        %1677 = vrot.lane.b32.xlu0 %v700, 32
        %v1678 = vpop.permute.xlu0 %1677
        %1679 = vrot.lane.b32.xlu0 %v701, 32
        %v1680 = vpop.permute.xlu0 %1679
        %1681 = vrot.lane.b32.xlu0 %v702, 32
        %v1682 = vpop.permute.xlu0 %1681
        %1683 = vrot.lane.b32.xlu0 %v703, 32
        %v1684 = vpop.permute.xlu0 %1683
        %1685 = vrot.lane.b32.xlu0 %v704, 32
        %v1686 = vpop.permute.xlu0 %1685
        %1687 = vrot.lane.b32.xlu0 %v705, 32
        %v1688 = vpop.permute.xlu0 %1687
        %1689 = vrot.lane.b32.xlu0 %v706, 32
        %v1690 = vpop.permute.xlu0 %1689
        %1691 = vrot.lane.b32.xlu0 %v707, 32
        %v1692 = vpop.permute.xlu0 %1691
        %1693 = vrot.lane.b32.xlu0 %v708, 32
        %v1694 = vpop.permute.xlu0 %1693
        %1695 = vrot.lane.b32.xlu0 %v709, 32
        %v1696 = vpop.permute.xlu0 %1695
        %1697 = vrot.lane.b32.xlu0 %v710, 32
        %v1698 = vpop.permute.xlu0 %1697
        %1699 = vrot.lane.b32.xlu0 %v711, 32
        %v1700 = vpop.permute.xlu0 %1699
        %1701 = vrot.lane.b32.xlu0 %v712, 32
        %v1702 = vpop.permute.xlu0 %1701
        %1703 = vrot.lane.b32.xlu0 %v713, 32
        %v1704 = vpop.permute.xlu0 %1703
        %1705 = vrot.lane.b32.xlu0 %v714, 32
        %v1706 = vpop.permute.xlu0 %1705
        %v1739 = vsel %vm347, %v426, %v748
        %v1740 = vsel %vm347, %v427, %v750
        %v1741 = vsel %vm347, %v428, %v752
        %v1742 = vsel %vm347, %v429, %v754
        %v1743 = vsel %vm347, %v430, %v756
        %v1744 = vsel %vm347, %v431, %v758
        %v1745 = vsel %vm347, %v432, %v760
        %v1746 = vsel %vm347, %v433, %v762
        %v1747 = vsel %vm347, %v434, %v764
        %v1748 = vsel %vm347, %v435, %v766
        %v1749 = vsel %vm347, %v436, %v768
        %v1750 = vsel %vm347, %v437, %v770
        %v1751 = vsel %vm347, %v438, %v772
        %v1752 = vsel %vm347, %v439, %v774
        %v1753 = vsel %vm347, %v440, %v776
        %v1754 = vsel %vm347, %v441, %v778
        %v1755 = vsel %vm347, %v442, %v780
        %v1756 = vsel %vm347, %v443, %v782
        %v1757 = vsel %vm347, %v444, %v784
        %v1758 = vsel %vm347, %v445, %v786
        %v1759 = vsel %vm347, %v446, %v788
        %v1760 = vsel %vm347, %v447, %v790
        %v1761 = vsel %vm347, %v448, %v792
        %v1762 = vsel %vm347, %v449, %v794
        %v1763 = vsel %vm347, %v450, %v796
        %v1764 = vsel %vm347, %v451, %v798
        %v1765 = vsel %vm347, %v452, %v800
        %v1766 = vsel %vm347, %v453, %v802
        %v1767 = vsel %vm347, %v454, %v804
        %v1768 = vsel %vm347, %v455, %v806
        %v1769 = vsel %vm347, %v456, %v808
        %v1770 = vsel %vm347, %v457, %v810
        %vm1771 = vcmask 64512
        %v1772 = vsel %vm1771, %v1739, %v876
        %v1773 = vsel %vm1771, %v1740, %v878
        %v1774 = vsel %vm1771, %v1741, %v880
        %v1775 = vsel %vm1771, %v1742, %v882
        %v1776 = vsel %vm1771, %v1743, %v884
        %v1777 = vsel %vm1771, %v1744, %v886
        %v1778 = vsel %vm1771, %v1745, %v888
        %v1779 = vsel %vm1771, %v1746, %v890
        %v1780 = vsel %vm1771, %v1747, %v892
        %v1781 = vsel %vm1771, %v1748, %v894
        %v1782 = vsel %vm1771, %v1749, %v896
        %v1783 = vsel %vm1771, %v1750, %v898
        %v1784 = vsel %vm1771, %v1751, %v900
        %v1785 = vsel %vm1771, %v1752, %v902
        %v1786 = vsel %vm1771, %v1753, %v904
        %v1787 = vsel %vm1771, %v1754, %v906
        %v1788 = vsel %vm1771, %v1755, %v908
        %v1789 = vsel %vm1771, %v1756, %v910
        %v1790 = vsel %vm1771, %v1757, %v912
        %v1791 = vsel %vm1771, %v1758, %v914
        %v1792 = vsel %vm1771, %v1759, %v916
        %v1793 = vsel %vm1771, %v1760, %v918
        %v1794 = vsel %vm1771, %v1761, %v920
        %v1795 = vsel %vm1771, %v1762, %v922
        %v1796 = vsel %vm1771, %v1763, %v924
        %v1797 = vsel %vm1771, %v1764, %v926
        %v1798 = vsel %vm1771, %v1765, %v928
        %v1799 = vsel %vm1771, %v1766, %v930
        %v1800 = vsel %vm1771, %v1767, %v932
        %v1801 = vsel %vm1771, %v1768, %v934
        %v1802 = vsel %vm1771, %v1769, %v936
        %v1803 = vsel %vm1771, %v1770, %v938
        %vm1804 = vcmask 97280
        %v1805 = vsel %vm1804, %v1772, %v1004
        %v1806 = vsel %vm1804, %v1773, %v1006
        %v1807 = vsel %vm1804, %v1774, %v1008
        %v1808 = vsel %vm1804, %v1775, %v1010
        %v1809 = vsel %vm1804, %v1776, %v1012
        %v1810 = vsel %vm1804, %v1777, %v1014
        %v1811 = vsel %vm1804, %v1778, %v1016
        %v1812 = vsel %vm1804, %v1779, %v1018
        %v1813 = vsel %vm1804, %v1780, %v1020
        %v1814 = vsel %vm1804, %v1781, %v1022
        %v1815 = vsel %vm1804, %v1782, %v1024
        %v1816 = vsel %vm1804, %v1783, %v1026
        %v1817 = vsel %vm1804, %v1784, %v1028
        %v1818 = vsel %vm1804, %v1785, %v1030
        %v1819 = vsel %vm1804, %v1786, %v1032
        %v1820 = vsel %vm1804, %v1787, %v1034
        %v1821 = vsel %vm1804, %v1788, %v1036
        %v1822 = vsel %vm1804, %v1789, %v1038
        %v1823 = vsel %vm1804, %v1790, %v1040
        %v1824 = vsel %vm1804, %v1791, %v1042
        %v1825 = vsel %vm1804, %v1792, %v1044
        %v1826 = vsel %vm1804, %v1793, %v1046
        %v1827 = vsel %vm1804, %v1794, %v1048
        %v1828 = vsel %vm1804, %v1795, %v1050
        %v1829 = vsel %vm1804, %v1796, %v1052
        %v1830 = vsel %vm1804, %v1797, %v1054
        %v1831 = vsel %vm1804, %v1798, %v1056
        %v1832 = vsel %vm1804, %v1799, %v1058
        %v1833 = vsel %vm1804, %v1800, %v1060
        %v1834 = vsel %vm1804, %v1801, %v1062
        %v1835 = vsel %vm1804, %v1802, %v1064
        %v1836 = vsel %vm1804, %v1803, %v1066
        %vm1837 = vcmask 130048
        %v1838 = vsel %vm1837, %v1805, %v1132
        %v1839 = vsel %vm1837, %v1806, %v1134
        %v1840 = vsel %vm1837, %v1807, %v1136
        %v1841 = vsel %vm1837, %v1808, %v1138
        %v1842 = vsel %vm1837, %v1809, %v1140
        %v1843 = vsel %vm1837, %v1810, %v1142
        %v1844 = vsel %vm1837, %v1811, %v1144
        %v1845 = vsel %vm1837, %v1812, %v1146
        %v1846 = vsel %vm1837, %v1813, %v1148
        %v1847 = vsel %vm1837, %v1814, %v1150
        %v1848 = vsel %vm1837, %v1815, %v1152
        %v1849 = vsel %vm1837, %v1816, %v1154
        %v1850 = vsel %vm1837, %v1817, %v1156
        %v1851 = vsel %vm1837, %v1818, %v1158
        %v1852 = vsel %vm1837, %v1819, %v1160
        %v1853 = vsel %vm1837, %v1820, %v1162
        %v1854 = vsel %vm1837, %v1821, %v1164
        %v1855 = vsel %vm1837, %v1822, %v1166
        %v1856 = vsel %vm1837, %v1823, %v1168
        %v1857 = vsel %vm1837, %v1824, %v1170
        %v1858 = vsel %vm1837, %v1825, %v1172
        %v1859 = vsel %vm1837, %v1826, %v1174
        %v1860 = vsel %vm1837, %v1827, %v1176
        %v1861 = vsel %vm1837, %v1828, %v1178
        %v1862 = vsel %vm1837, %v1829, %v1180
        %v1863 = vsel %vm1837, %v1830, %v1182
        %v1864 = vsel %vm1837, %v1831, %v1184
        %v1865 = vsel %vm1837, %v1832, %v1186
        %v1866 = vsel %vm1837, %v1833, %v1188
        %v1867 = vsel %vm1837, %v1834, %v1190
        %v1868 = vsel %vm1837, %v1835, %v1192
        %v1869 = vsel %vm1837, %v1836, %v1194
        %vm1870 = vcmask 162816
        %v1871 = vsel %vm1870, %v1838, %v1260
        %v1872 = vsel %vm1870, %v1839, %v1262
        %v1873 = vsel %vm1870, %v1840, %v1264
        %v1874 = vsel %vm1870, %v1841, %v1266
        %v1875 = vsel %vm1870, %v1842, %v1268
        %v1876 = vsel %vm1870, %v1843, %v1270
        %v1877 = vsel %vm1870, %v1844, %v1272
        %v1878 = vsel %vm1870, %v1845, %v1274
        %v1879 = vsel %vm1870, %v1846, %v1276
        %v1880 = vsel %vm1870, %v1847, %v1278
        %v1881 = vsel %vm1870, %v1848, %v1280
        %v1882 = vsel %vm1870, %v1849, %v1282
        %v1883 = vsel %vm1870, %v1850, %v1284
        %v1884 = vsel %vm1870, %v1851, %v1286
        %v1885 = vsel %vm1870, %v1852, %v1288
        %v1886 = vsel %vm1870, %v1853, %v1290
        %v1887 = vsel %vm1870, %v1854, %v1292
        %v1888 = vsel %vm1870, %v1855, %v1294
        %v1889 = vsel %vm1870, %v1856, %v1296
        %v1890 = vsel %vm1870, %v1857, %v1298
        %v1891 = vsel %vm1870, %v1858, %v1300
        %v1892 = vsel %vm1870, %v1859, %v1302
        %v1893 = vsel %vm1870, %v1860, %v1304
        %v1894 = vsel %vm1870, %v1861, %v1306
        %v1895 = vsel %vm1870, %v1862, %v1308
        %v1896 = vsel %vm1870, %v1863, %v1310
        %v1897 = vsel %vm1870, %v1864, %v1312
        %v1898 = vsel %vm1870, %v1865, %v1314
        %v1899 = vsel %vm1870, %v1866, %v1316
        %v1900 = vsel %vm1870, %v1867, %v1318
        %v1901 = vsel %vm1870, %v1868, %v1320
        %v1902 = vsel %vm1870, %v1869, %v1322
        %vm1903 = vcmask 195584
        %v1904 = vsel %vm1903, %v1871, %v1388
        %v1905 = vsel %vm1903, %v1872, %v1390
        %v1906 = vsel %vm1903, %v1873, %v1392
        %v1907 = vsel %vm1903, %v1874, %v1394
        %v1908 = vsel %vm1903, %v1875, %v1396
        %v1909 = vsel %vm1903, %v1876, %v1398
        %v1910 = vsel %vm1903, %v1877, %v1400
        %v1911 = vsel %vm1903, %v1878, %v1402
        %v1912 = vsel %vm1903, %v1879, %v1404
        %v1913 = vsel %vm1903, %v1880, %v1406
        %v1914 = vsel %vm1903, %v1881, %v1408
        %v1915 = vsel %vm1903, %v1882, %v1410
        %v1916 = vsel %vm1903, %v1883, %v1412
        %v1917 = vsel %vm1903, %v1884, %v1414
        %v1918 = vsel %vm1903, %v1885, %v1416
        %v1919 = vsel %vm1903, %v1886, %v1418
        %v1920 = vsel %vm1903, %v1887, %v1420
        %v1921 = vsel %vm1903, %v1888, %v1422
        %v1922 = vsel %vm1903, %v1889, %v1424
        %v1923 = vsel %vm1903, %v1890, %v1426
        %v1924 = vsel %vm1903, %v1891, %v1428
        %v1925 = vsel %vm1903, %v1892, %v1430
        %v1926 = vsel %vm1903, %v1893, %v1432
        %v1927 = vsel %vm1903, %v1894, %v1434
        %v1928 = vsel %vm1903, %v1895, %v1436
        %v1929 = vsel %vm1903, %v1896, %v1438
        %v1930 = vsel %vm1903, %v1897, %v1440
        %v1931 = vsel %vm1903, %v1898, %v1442
        %v1932 = vsel %vm1903, %v1899, %v1444
        %v1933 = vsel %vm1903, %v1900, %v1446
        %v1934 = vsel %vm1903, %v1901, %v1448
        %v1935 = vsel %vm1903, %v1902, %v1450
        %vm1936 = vcmask 228352
        %v1937 = vsel %vm1936, %v1904, %v1516
        %v1938 = vsel %vm1936, %v1905, %v1518
        %v1939 = vsel %vm1936, %v1906, %v1520
        %v1940 = vsel %vm1936, %v1907, %v1522
        %v1941 = vsel %vm1936, %v1908, %v1524
        %v1942 = vsel %vm1936, %v1909, %v1526
        %v1943 = vsel %vm1936, %v1910, %v1528
        %v1944 = vsel %vm1936, %v1911, %v1530
        %v1945 = vsel %vm1936, %v1912, %v1532
        %v1946 = vsel %vm1936, %v1913, %v1534
        %v1947 = vsel %vm1936, %v1914, %v1536
        %v1948 = vsel %vm1936, %v1915, %v1538
        %v1949 = vsel %vm1936, %v1916, %v1540
        %v1950 = vsel %vm1936, %v1917, %v1542
        %v1951 = vsel %vm1936, %v1918, %v1544
        %v1952 = vsel %vm1936, %v1919, %v1546
        %v1953 = vsel %vm1936, %v1920, %v1548
        %v1954 = vsel %vm1936, %v1921, %v1550
        %v1955 = vsel %vm1936, %v1922, %v1552
        %v1956 = vsel %vm1936, %v1923, %v1554
        %v1957 = vsel %vm1936, %v1924, %v1556
        %v1958 = vsel %vm1936, %v1925, %v1558
        %v1959 = vsel %vm1936, %v1926, %v1560
        %v1960 = vsel %vm1936, %v1927, %v1562
        %v1961 = vsel %vm1936, %v1928, %v1564
        %v1962 = vsel %vm1936, %v1929, %v1566
        %v1963 = vsel %vm1936, %v1930, %v1568
        %v1964 = vsel %vm1936, %v1931, %v1570
        %v1965 = vsel %vm1936, %v1932, %v1572
        %v1966 = vsel %vm1936, %v1933, %v1574
        %v1967 = vsel %vm1936, %v1934, %v1576
        %v1968 = vsel %vm1936, %v1935, %v1578
        %vm1969 = vcmask 261120
        %v1970 = vsel %vm1969, %v1937, %v1644
        %v1971 = vsel %vm1969, %v1938, %v1646
        %v1972 = vsel %vm1969, %v1939, %v1648
        %v1973 = vsel %vm1969, %v1940, %v1650
        %v1974 = vsel %vm1969, %v1941, %v1652
        %v1975 = vsel %vm1969, %v1942, %v1654
        %v1976 = vsel %vm1969, %v1943, %v1656
        %v1977 = vsel %vm1969, %v1944, %v1658
        %v1978 = vsel %vm1969, %v1945, %v1660
        %v1979 = vsel %vm1969, %v1946, %v1662
        %v1980 = vsel %vm1969, %v1947, %v1664
        %v1981 = vsel %vm1969, %v1948, %v1666
        %v1982 = vsel %vm1969, %v1949, %v1668
        %v1983 = vsel %vm1969, %v1950, %v1670
        %v1984 = vsel %vm1969, %v1951, %v1672
        %v1985 = vsel %vm1969, %v1952, %v1674
        %v1986 = vsel %vm1969, %v1953, %v1676
        %v1987 = vsel %vm1969, %v1954, %v1678
        %v1988 = vsel %vm1969, %v1955, %v1680
        %v1989 = vsel %vm1969, %v1956, %v1682
        %v1990 = vsel %vm1969, %v1957, %v1684
        %v1991 = vsel %vm1969, %v1958, %v1686
        %v1992 = vsel %vm1969, %v1959, %v1688
        %v1993 = vsel %vm1969, %v1960, %v1690
        %v1994 = vsel %vm1969, %v1961, %v1692
        %v1995 = vsel %vm1969, %v1962, %v1694
        %v1996 = vsel %vm1969, %v1963, %v1696
        %v1997 = vsel %vm1969, %v1964, %v1698
        %v1998 = vsel %vm1969, %v1965, %v1700
        %v1999 = vsel %vm1969, %v1966, %v1702
        %v2000 = vsel %vm1969, %v1967, %v1704
        %v2001 = vsel %vm1969, %v1968, %v1706
        %v2002 = vpack.c.bf16 %v1971, %v1970
        %v2003 = vpack.c.bf16 %v1973, %v1972
        %v2004 = vpack.c.bf16 %v1975, %v1974
        %v2005 = vpack.c.bf16 %v1977, %v1976
        %v2006 = vpack.c.bf16 %v1979, %v1978
        %v2007 = vpack.c.bf16 %v1981, %v1980
        %v2008 = vpack.c.bf16 %v1983, %v1982
        %v2009 = vpack.c.bf16 %v1985, %v1984
        %v2010 = vpack.c.bf16 %v1987, %v1986
        %v2011 = vpack.c.bf16 %v1989, %v1988
        %v2012 = vpack.c.bf16 %v1991, %v1990
        %v2013 = vpack.c.bf16 %v1993, %v1992
        %v2014 = vpack.c.bf16 %v1995, %v1994
        %v2015 = vpack.c.bf16 %v1997, %v1996
        %v2016 = vpack.c.bf16 %v1999, %v1998
        %v2017 = vpack.c.bf16 %v2001, %v2000
        %v2018 = vld [vmem:[%s2] sm:$0xf]
        %v2019 = vld [vmem:[%s2 + $0x4] sm:$0xf]
        %v2020 = vld [vmem:[%s2 + $0x8] sm:$0xf]
        %v2021 = vld [vmem:[%s2 + $0xc] sm:$0xf]
        %v2022 = vld [vmem:[%s2 + $0x10] sm:$0x3]
        %v2028 = vunpack.c.l.b16 %v2018
        %v2029 = vunpack.c.l.b16 %v2019
        %v2030 = vunpack.c.l.b16 %v2020
        %v2031 = vunpack.c.l.b16 %v2021
        %v2032 = vunpack.c.l.b16 %v2022
        %v2033 = vpack.c.b16 %v2029, %v2028
        %v2034 = vpack.c.b16 %v2031, %v2030
        %v2035 = vpack.c.b16 %v2032, %v2032
        %vm2038 = vcmask 293888
        %v2040 = vsel %vm2038, %v2002, 0
        %v2043 = vsel %vm2038, %v2003, 0
        %v2046 = vsel %vm2038, %v2004, 0
        %v2049 = vsel %vm2038, %v2005, 0
        %v2052 = vsel %vm2038, %v2006, 0
        %v2055 = vsel %vm2038, %v2007, 0
        %v2058 = vsel %vm2038, %v2008, 0
        %v2061 = vsel %vm2038, %v2009, 0
        %v2064 = vsel %vm2038, %v2010, 0
        %v2067 = vsel %vm2038, %v2011, 0
        %v2070 = vsel %vm2038, %v2012, 0
        %v2073 = vsel %vm2038, %v2013, 0
        %v2076 = vsel %vm2038, %v2014, 0
        %v2079 = vsel %vm2038, %v2015, 0
        %v2082 = vsel %vm2038, %v2016, 0
        %v2085 = vsel %vm2038, %v2017, 0
        %vm2087 = vcmask 1041408
        %v2089 = vsel %vm2087, %v2035, 0
        %2091 = vmatprep.subr.bf16.mxu0 0
        %2092 = vmatpush1.bf16.msra.mxu0 %v2033
        %2093 = vmatprep.subr.bf16.mxu0 0
        %2094 = vmatpush1.bf16.msra.mxu0 %v2034
        %2095 = vmatprep.subr.bf16.mxu0 0
        %2096 = vmatpush1.bf16.msra.mxu0 %v2089
        %2097 = vmatprep.subr.bf16.mxu0 0
        %2098 = vmatpush1.bf16.msra.mxu0 0
        %2099 = vmatprep.subr.bf16.mxu0 0
        %2100 = vmatpush1.bf16.msra.mxu0 0
        %2101 = vmatprep.subr.bf16.mxu0 0
        %2102 = vmatpush1.bf16.msra.mxu0 0
        %2103 = vmatprep.subr.bf16.mxu0 0
        %2104 = vmatpush1.bf16.msra.mxu0 0
        %2105 = vmatprep.subr.bf16.mxu0 0
        %2106 = vmatpush1.bf16.msra.mxu0 0
        %2107 = vmatprep.subr.bf16.mxu0 0
        %2108 = vmatpush1.bf16.msra.mxu0 0
        %2109 = vmatprep.subr.bf16.mxu0 0
        %2110 = vmatpush1.bf16.msra.mxu0 0
        %2111 = vmatprep.subr.bf16.mxu0 0
        %2112 = vmatpush1.bf16.msra.mxu0 0
        %2113 = vmatprep.subr.bf16.mxu0 0
        %2114 = vmatpush1.bf16.msra.mxu0 0
        %2115 = vmatprep.subr.bf16.mxu0 0
        %2116 = vmatpush1.bf16.msra.mxu0 0
        %2117 = vmatprep.subr.bf16.mxu0 0
        %2118 = vmatpush1.bf16.msra.mxu0 0
        %2119 = vmatprep.subr.bf16.mxu0 0
        %2120 = vmatpush1.bf16.msra.mxu0 0
        %2121 = vmatprep.subr.bf16.mxu0 0
        %2122 = vmatpush1.bf16.msra.mxu0 0
        %2123 = vmatprep.mubr.bf16.mxu0 0
        %2124 = vmatmul.mubr.bf16.gmra.mrb[0].mxu0 %v2040
        %v2125 = vpop.f32.mrb[0].mxu0
        %v2126 = vadd.f32 0.0, %v2125
        %v2127 = vpop.f32.mrb[0].mxu0
        %v2128 = vpop.f32.mrb[0].mxu0
        %v2129 = vadd.f32 0.0, %v2128
        %v2130 = vpop.f32.mrb[0].mxu0
        %2131 = vmatprep.mubr.bf16.mxu0 0
        %2132 = vmatmul.mubr.bf16.gmra.mrb[0].mxu0 %v2043
        %v2133 = vpop.f32.mrb[0].mxu0
        %v2134 = vadd.f32 0.0, %v2133
        %v2135 = vpop.f32.mrb[0].mxu0
        %v2136 = vpop.f32.mrb[0].mxu0
        %v2137 = vadd.f32 0.0, %v2136
        %v2138 = vpop.f32.mrb[0].mxu0
        %2139 = vmatprep.mubr.bf16.mxu0 0
        %2140 = vmatmul.mubr.bf16.gmra.mrb[0].mxu0 %v2046
        %v2141 = vpop.f32.mrb[0].mxu0
        %v2142 = vadd.f32 0.0, %v2141
        %v2143 = vpop.f32.mrb[0].mxu0
        %v2144 = vpop.f32.mrb[0].mxu0
        %v2145 = vadd.f32 0.0, %v2144
        %v2146 = vpop.f32.mrb[0].mxu0
        %2147 = vmatprep.mubr.bf16.mxu0 0
        %2148 = vmatmul.mubr.bf16.gmra.mrb[0].mxu0 %v2049
        %v2149 = vpop.f32.mrb[0].mxu0
        %v2150 = vadd.f32 0.0, %v2149
        %v2151 = vpop.f32.mrb[0].mxu0
        %v2152 = vpop.f32.mrb[0].mxu0
        %v2153 = vadd.f32 0.0, %v2152
        %v2154 = vpop.f32.mrb[0].mxu0
        %2155 = vmatprep.mubr.bf16.mxu0 0
        %2156 = vmatmul.mubr.bf16.gmra.mrb[0].mxu0 %v2052
        %v2157 = vpop.f32.mrb[0].mxu0
        %v2158 = vadd.f32 0.0, %v2157
        %v2159 = vpop.f32.mrb[0].mxu0
        %v2160 = vpop.f32.mrb[0].mxu0
        %v2161 = vadd.f32 0.0, %v2160
        %v2162 = vpop.f32.mrb[0].mxu0
        %2163 = vmatprep.mubr.bf16.mxu0 0
        %2164 = vmatmul.mubr.bf16.gmra.mrb[0].mxu0 %v2055
        %v2165 = vpop.f32.mrb[0].mxu0
        %v2166 = vadd.f32 0.0, %v2165
        %v2167 = vpop.f32.mrb[0].mxu0
        %v2168 = vpop.f32.mrb[0].mxu0
        %v2169 = vadd.f32 0.0, %v2168
        %v2170 = vpop.f32.mrb[0].mxu0
        %2171 = vmatprep.mubr.bf16.mxu0 0
        %2172 = vmatmul.mubr.bf16.gmra.mrb[0].mxu0 %v2058
        %v2173 = vpop.f32.mrb[0].mxu0
        %v2174 = vadd.f32 0.0, %v2173
        %v2175 = vpop.f32.mrb[0].mxu0
        %v2176 = vpop.f32.mrb[0].mxu0
        %v2177 = vadd.f32 0.0, %v2176
        %v2178 = vpop.f32.mrb[0].mxu0
        %2179 = vmatprep.mubr.bf16.mxu0 0
        %2180 = vmatmul.mubr.bf16.gmra.mrb[0].mxu0 %v2061
        %v2181 = vpop.f32.mrb[0].mxu0
        %v2182 = vadd.f32 0.0, %v2181
        %v2183 = vpop.f32.mrb[0].mxu0
        %v2184 = vpop.f32.mrb[0].mxu0
        %v2185 = vadd.f32 0.0, %v2184
        %v2186 = vpop.f32.mrb[0].mxu0
        %2187 = vmatprep.mubr.bf16.mxu0 0
        %2188 = vmatmul.mubr.bf16.gmra.mrb[0].mxu0 %v2064
        %v2189 = vpop.f32.mrb[0].mxu0
        %v2190 = vadd.f32 0.0, %v2189
        %v2191 = vpop.f32.mrb[0].mxu0
        %v2192 = vpop.f32.mrb[0].mxu0
        %v2193 = vadd.f32 0.0, %v2192
        %v2194 = vpop.f32.mrb[0].mxu0
        %2195 = vmatprep.mubr.bf16.mxu0 0
        %2196 = vmatmul.mubr.bf16.gmra.mrb[0].mxu0 %v2067
        %v2197 = vpop.f32.mrb[0].mxu0
        %v2198 = vadd.f32 0.0, %v2197
        %v2199 = vpop.f32.mrb[0].mxu0
        %v2200 = vpop.f32.mrb[0].mxu0
        %v2201 = vadd.f32 0.0, %v2200
        %v2202 = vpop.f32.mrb[0].mxu0
        %2203 = vmatprep.mubr.bf16.mxu0 0
        %2204 = vmatmul.mubr.bf16.gmra.mrb[0].mxu0 %v2070
        %v2205 = vpop.f32.mrb[0].mxu0
        %v2206 = vadd.f32 0.0, %v2205
        %v2207 = vpop.f32.mrb[0].mxu0
        %v2208 = vpop.f32.mrb[0].mxu0
        %v2209 = vadd.f32 0.0, %v2208
        %v2210 = vpop.f32.mrb[0].mxu0
        %2211 = vmatprep.mubr.bf16.mxu0 0
        %2212 = vmatmul.mubr.bf16.gmra.mrb[0].mxu0 %v2073
        %v2213 = vpop.f32.mrb[0].mxu0
        %v2214 = vadd.f32 0.0, %v2213
        %v2215 = vpop.f32.mrb[0].mxu0
        %v2216 = vpop.f32.mrb[0].mxu0
        %v2217 = vadd.f32 0.0, %v2216
        %v2218 = vpop.f32.mrb[0].mxu0
        %2219 = vmatprep.mubr.bf16.mxu0 0
        %2220 = vmatmul.mubr.bf16.gmra.mrb[0].mxu0 %v2076
        %v2221 = vpop.f32.mrb[0].mxu0
        %v2222 = vadd.f32 0.0, %v2221
        %v2223 = vpop.f32.mrb[0].mxu0
        %v2224 = vpop.f32.mrb[0].mxu0
        %v2225 = vadd.f32 0.0, %v2224
        %v2226 = vpop.f32.mrb[0].mxu0
        %2227 = vmatprep.mubr.bf16.mxu0 0
        %2228 = vmatmul.mubr.bf16.gmra.mrb[0].mxu0 %v2079
        %v2229 = vpop.f32.mrb[0].mxu0
        %v2230 = vadd.f32 0.0, %v2229
        %v2231 = vpop.f32.mrb[0].mxu0
        %v2232 = vpop.f32.mrb[0].mxu0
        %v2233 = vadd.f32 0.0, %v2232
        %v2234 = vpop.f32.mrb[0].mxu0
        %2235 = vmatprep.mubr.bf16.mxu0 0
        %2236 = vmatmul.mubr.bf16.gmra.mrb[0].mxu0 %v2082
        %v2237 = vpop.f32.mrb[0].mxu0
        %v2238 = vadd.f32 0.0, %v2237
        %v2239 = vpop.f32.mrb[0].mxu0
        %v2240 = vpop.f32.mrb[0].mxu0
        %v2241 = vadd.f32 0.0, %v2240
        %v2242 = vpop.f32.mrb[0].mxu0
        %2243 = vmatprep.mubr.bf16.mxu0 0
        %2244 = vmatmul.mubr.bf16.gmra.mrb[0].mxu0 %v2085
        %v2245 = vpop.f32.mrb[0].mxu0
        %v2246 = vadd.f32 0.0, %v2245
        %v2247 = vpop.f32.mrb[0].mxu0
        %v2248 = vpop.f32.mrb[0].mxu0
        %v2249 = vadd.f32 0.0, %v2248
        %v2250 = vpop.f32.mrb[0].mxu0
        %2251 = vdwg.mxu0
        %v2252 = vpack.c.bf16 %v2129, %v2126
        %v2253 = vpack.c.bf16 %v2137, %v2134
        %v2254 = vpack.c.bf16 %v2145, %v2142
        %v2255 = vpack.c.bf16 %v2153, %v2150
        %v2256 = vpack.c.bf16 %v2161, %v2158
        %v2257 = vpack.c.bf16 %v2169, %v2166
        %v2258 = vpack.c.bf16 %v2177, %v2174
        %v2259 = vpack.c.bf16 %v2185, %v2182
        %v2260 = vpack.c.bf16 %v2193, %v2190
        %v2261 = vpack.c.bf16 %v2201, %v2198
        %v2262 = vpack.c.bf16 %v2209, %v2206
        %v2263 = vpack.c.bf16 %v2217, %v2214
        %v2264 = vpack.c.bf16 %v2225, %v2222
        %v2265 = vpack.c.bf16 %v2233, %v2230
        %v2266 = vpack.c.bf16 %v2241, %v2238
        %v2267 = vpack.c.bf16 %v2249, %v2246
        %v2284 = vunpack.c.l.b16 %v2252
        %v2285 = vunpack.c.h.b16 %v2252
        %v2286 = vunpack.c.l.b16 %v2253
        %v2287 = vunpack.c.h.b16 %v2253
        %v2288 = vunpack.c.l.b16 %v2254
        %v2289 = vunpack.c.h.b16 %v2254
        %v2290 = vunpack.c.l.b16 %v2255
        %v2291 = vunpack.c.h.b16 %v2255
        %v2292 = vunpack.c.l.b16 %v2256
        %v2293 = vunpack.c.h.b16 %v2256
        %v2294 = vunpack.c.l.b16 %v2257
        %v2295 = vunpack.c.h.b16 %v2257
        %v2296 = vunpack.c.l.b16 %v2258
        %v2297 = vunpack.c.h.b16 %v2258
        %v2298 = vunpack.c.l.b16 %v2259
        %v2299 = vunpack.c.h.b16 %v2259
        %v2300 = vunpack.c.l.b16 %v2260
        %v2301 = vunpack.c.h.b16 %v2260
        %v2302 = vunpack.c.l.b16 %v2261
        %v2303 = vunpack.c.h.b16 %v2261
        %v2304 = vunpack.c.l.b16 %v2262
        %v2305 = vunpack.c.h.b16 %v2262
        %v2306 = vunpack.c.l.b16 %v2263
        %v2307 = vunpack.c.h.b16 %v2263
        %v2308 = vunpack.c.l.b16 %v2264
        %v2309 = vunpack.c.h.b16 %v2264
        %v2310 = vunpack.c.l.b16 %v2265
        %v2311 = vunpack.c.h.b16 %v2265
        %v2312 = vunpack.c.l.b16 %v2266
        %v2313 = vunpack.c.h.b16 %v2266
        %v2314 = vunpack.c.l.b16 %v2267
        %v2315 = vunpack.c.h.b16 %v2267
        %v2316 = vpack.c.b16 %v2284, %v2284
        %v2317 = vpack.c.b16 %v2285, %v2285
        %v2318 = vpack.c.b16 %v2286, %v2286
        %v2319 = vpack.c.b16 %v2287, %v2287
        %v2320 = vpack.c.b16 %v2288, %v2288
        %v2321 = vpack.c.b16 %v2289, %v2289
        %v2322 = vpack.c.b16 %v2290, %v2290
        %v2323 = vpack.c.b16 %v2291, %v2291
        %v2324 = vpack.c.b16 %v2292, %v2292
        %v2325 = vpack.c.b16 %v2293, %v2293
        %v2326 = vpack.c.b16 %v2294, %v2294
        %v2327 = vpack.c.b16 %v2295, %v2295
        %v2328 = vpack.c.b16 %v2296, %v2296
        %v2329 = vpack.c.b16 %v2297, %v2297
        %v2330 = vpack.c.b16 %v2298, %v2298
        %v2331 = vpack.c.b16 %v2299, %v2299
        %v2332 = vpack.c.b16 %v2300, %v2300
        %v2333 = vpack.c.b16 %v2301, %v2301
        %v2334 = vpack.c.b16 %v2302, %v2302
        %v2335 = vpack.c.b16 %v2303, %v2303
        %v2336 = vpack.c.b16 %v2304, %v2304
        %v2337 = vpack.c.b16 %v2305, %v2305
        %v2338 = vpack.c.b16 %v2306, %v2306
        %v2339 = vpack.c.b16 %v2307, %v2307
        %v2340 = vpack.c.b16 %v2308, %v2308
        %v2341 = vpack.c.b16 %v2309, %v2309
        %v2342 = vpack.c.b16 %v2310, %v2310
        %v2343 = vpack.c.b16 %v2311, %v2311
        %v2344 = vpack.c.b16 %v2312, %v2312
        %v2345 = vpack.c.b16 %v2313, %v2313
        %v2346 = vpack.c.b16 %v2314, %v2314
        %v2347 = vpack.c.b16 %v2315, %v2315
        %vm2380 = vcmask 27648
        %2381 = vst.msk [vmem:[%s208] sm:$0xf] %vm2380, %v2316
        %2382 = vst.msk [vmem:[%s208 + $0x4] sm:$0xf] %vm2380, %v2317
        %2383 = vst.msk [vmem:[%s208 + $0x8] sm:$0xf] %vm2380, %v2318
        %2384 = vst.msk [vmem:[%s208 + $0xc] sm:$0xf] %vm2380, %v2319
        %2385 = vst.msk [vmem:[%s208 + $0x10] sm:$0xf] %vm2380, %v2320
        %2386 = vst.msk [vmem:[%s208 + $0x14] sm:$0xf] %vm2380, %v2321
        %2387 = vst.msk [vmem:[%s208 + $0x18] sm:$0xf] %vm2380, %v2322
        %2388 = vst.msk [vmem:[%s208 + $0x1c] sm:$0xf] %vm2380, %v2323
        %2389 = vst.msk [vmem:[%s208 + $0x20] sm:$0xf] %vm2380, %v2324
        %2390 = vst.msk [vmem:[%s208 + $0x24] sm:$0xf] %vm2380, %v2325
        %2391 = vst.msk [vmem:[%s208 + $0x28] sm:$0xf] %vm2380, %v2326
        %2392 = vst.msk [vmem:[%s208 + $0x2c] sm:$0xf] %vm2380, %v2327
        %2393 = vst.msk [vmem:[%s208 + $0x30] sm:$0xf] %vm2380, %v2328
        %2394 = vst.msk [vmem:[%s208 + $0x34] sm:$0xf] %vm2380, %v2329
        %2395 = vst.msk [vmem:[%s208 + $0x38] sm:$0xf] %vm2380, %v2330
        %2396 = vst.msk [vmem:[%s208 + $0x3c] sm:$0xf] %vm2380, %v2331
        %2397 = vst.msk [vmem:[%s208 + $0x40] sm:$0xf] %vm2380, %v2332
        %2398 = vst.msk [vmem:[%s208 + $0x44] sm:$0xf] %vm2380, %v2333
        %2399 = vst.msk [vmem:[%s208 + $0x48] sm:$0xf] %vm2380, %v2334
        %2400 = vst.msk [vmem:[%s208 + $0x4c] sm:$0xf] %vm2380, %v2335
        %2401 = vst.msk [vmem:[%s208 + $0x50] sm:$0xf] %vm2380, %v2336
        %2402 = vst.msk [vmem:[%s208 + $0x54] sm:$0xf] %vm2380, %v2337
        %2403 = vst.msk [vmem:[%s208 + $0x58] sm:$0xf] %vm2380, %v2338
        %2404 = vst.msk [vmem:[%s208 + $0x5c] sm:$0xf] %vm2380, %v2339
        %2405 = vst.msk [vmem:[%s208 + $0x60] sm:$0xf] %vm2380, %v2340
        %2406 = vst.msk [vmem:[%s208 + $0x64] sm:$0xf] %vm2380, %v2341
        %2407 = vst.msk [vmem:[%s208 + $0x68] sm:$0xf] %vm2380, %v2342
        %2408 = vst.msk [vmem:[%s208 + $0x6c] sm:$0xf] %vm2380, %v2343
        %2409 = vst.msk [vmem:[%s208 + $0x70] sm:$0xf] %vm2380, %v2344
        %2410 = vst.msk [vmem:[%s208 + $0x74] sm:$0xf] %vm2380, %v2345
        %2411 = vst.msk [vmem:[%s208 + $0x78] sm:$0xf] %vm2380, %v2346
        %2412 = vst.msk [vmem:[%s208 + $0x7c] sm:$0xf] %vm2380, %v2347
        %v2413 = vsel %vm347, %v2126, 0.0
        %v2414 = vsel %vm347, %v2129, 0.0
        %v2415 = vadd.f32 %v2413, %v2414
        %v2416 = vsel %vm347, %v2134, 0.0
        %v2417 = vadd.f32 %v2415, %v2416
        %v2418 = vsel %vm347, %v2137, 0.0
        %v2419 = vadd.f32 %v2417, %v2418
        %v2420 = vsel %vm347, %v2142, 0.0
        %v2421 = vadd.f32 %v2419, %v2420
        %v2422 = vsel %vm347, %v2145, 0.0
        %v2423 = vadd.f32 %v2421, %v2422
        %v2424 = vsel %vm347, %v2150, 0.0
        %v2425 = vadd.f32 %v2423, %v2424
        %v2426 = vsel %vm347, %v2153, 0.0
        %v2427 = vadd.f32 %v2425, %v2426
        %v2428 = vsel %vm347, %v2158, 0.0
        %v2429 = vadd.f32 %v2427, %v2428
        %v2430 = vsel %vm347, %v2161, 0.0
        %v2431 = vadd.f32 %v2429, %v2430
        %v2432 = vsel %vm347, %v2166, 0.0
        %v2433 = vadd.f32 %v2431, %v2432
        %v2434 = vsel %vm347, %v2169, 0.0
        %v2435 = vadd.f32 %v2433, %v2434
        %v2436 = vsel %vm347, %v2174, 0.0
        %v2437 = vadd.f32 %v2435, %v2436
        %v2438 = vsel %vm347, %v2177, 0.0
        %v2439 = vadd.f32 %v2437, %v2438
        %v2440 = vsel %vm347, %v2182, 0.0
        %v2441 = vadd.f32 %v2439, %v2440
        %v2442 = vsel %vm347, %v2185, 0.0
        %v2443 = vadd.f32 %v2441, %v2442
        %v2444 = vsel %vm347, %v2190, 0.0
        %v2445 = vadd.f32 %v2443, %v2444
        %v2446 = vsel %vm347, %v2193, 0.0
        %v2447 = vadd.f32 %v2445, %v2446
        %v2448 = vsel %vm347, %v2198, 0.0
        %v2449 = vadd.f32 %v2447, %v2448
        %v2450 = vsel %vm347, %v2201, 0.0
        %v2451 = vadd.f32 %v2449, %v2450
        %v2452 = vsel %vm347, %v2206, 0.0
        %v2453 = vadd.f32 %v2451, %v2452
        %v2454 = vsel %vm347, %v2209, 0.0
        %v2455 = vadd.f32 %v2453, %v2454
        %v2456 = vsel %vm347, %v2214, 0.0
        %v2457 = vadd.f32 %v2455, %v2456
        %v2458 = vsel %vm347, %v2217, 0.0
        %v2459 = vadd.f32 %v2457, %v2458
        %v2460 = vsel %vm347, %v2222, 0.0
        %v2461 = vadd.f32 %v2459, %v2460
        %v2462 = vsel %vm347, %v2225, 0.0
        %v2463 = vadd.f32 %v2461, %v2462
        %v2464 = vsel %vm347, %v2230, 0.0
        %v2465 = vadd.f32 %v2463, %v2464
        %v2466 = vsel %vm347, %v2233, 0.0
        %v2467 = vadd.f32 %v2465, %v2466
        %v2468 = vsel %vm347, %v2238, 0.0
        %v2469 = vadd.f32 %v2467, %v2468
        %v2470 = vsel %vm347, %v2241, 0.0
        %v2471 = vadd.f32 %v2469, %v2470
        %v2472 = vsel %vm347, %v2246, 0.0
        %v2473 = vadd.f32 %v2471, %v2472
        %v2474 = vsel %vm347, %v2249, 0.0
        %v2475 = vadd.f32 %v2473, %v2474
        %v2476 = vrot.slane %v2475, 4
        %v2477 = vadd.f32 %v2475, %v2476
        %v2478 = vrot.slane %v2477, 2
        %v2479 = vadd.f32 %v2477, %v2478
        %v2480 = vrot.slane %v2479, 1
        %v2481 = vadd.f32 %v2479, %v2480
        %v2482 = vmul.f32 %v2126, %v2126
        %v2483 = vmul.f32 %v2129, %v2129
        %v2484 = vmul.f32 %v2134, %v2134
        %v2485 = vmul.f32 %v2137, %v2137
        %v2486 = vmul.f32 %v2142, %v2142
        %v2487 = vmul.f32 %v2145, %v2145
        %v2488 = vmul.f32 %v2150, %v2150
        %v2489 = vmul.f32 %v2153, %v2153
        %v2490 = vmul.f32 %v2158, %v2158
        %v2491 = vmul.f32 %v2161, %v2161
        %v2492 = vmul.f32 %v2166, %v2166
        %v2493 = vmul.f32 %v2169, %v2169
        %v2494 = vmul.f32 %v2174, %v2174
        %v2495 = vmul.f32 %v2177, %v2177
        %v2496 = vmul.f32 %v2182, %v2182
        %v2497 = vmul.f32 %v2185, %v2185
        %v2498 = vmul.f32 %v2190, %v2190
        %v2499 = vmul.f32 %v2193, %v2193
        %v2500 = vmul.f32 %v2198, %v2198
        %v2501 = vmul.f32 %v2201, %v2201
        %v2502 = vmul.f32 %v2206, %v2206
        %v2503 = vmul.f32 %v2209, %v2209
        %v2504 = vmul.f32 %v2214, %v2214
        %v2505 = vmul.f32 %v2217, %v2217
        %v2506 = vmul.f32 %v2222, %v2222
        %v2507 = vmul.f32 %v2225, %v2225
        %v2508 = vmul.f32 %v2230, %v2230
        %v2509 = vmul.f32 %v2233, %v2233
        %v2510 = vmul.f32 %v2238, %v2238
        %v2511 = vmul.f32 %v2241, %v2241
        %v2512 = vmul.f32 %v2246, %v2246
        %v2513 = vmul.f32 %v2249, %v2249
        %v2514 = vsel %vm347, %v2482, 0.0
        %v2515 = vsel %vm347, %v2483, 0.0
        %v2516 = vadd.f32 %v2514, %v2515
        %v2517 = vsel %vm347, %v2484, 0.0
        %v2518 = vadd.f32 %v2516, %v2517
        %v2519 = vsel %vm347, %v2485, 0.0
        %v2520 = vadd.f32 %v2518, %v2519
        %v2521 = vsel %vm347, %v2486, 0.0
        %v2522 = vadd.f32 %v2520, %v2521
        %v2523 = vsel %vm347, %v2487, 0.0
        %v2524 = vadd.f32 %v2522, %v2523
        %v2525 = vsel %vm347, %v2488, 0.0
        %v2526 = vadd.f32 %v2524, %v2525
        %v2527 = vsel %vm347, %v2489, 0.0
        %v2528 = vadd.f32 %v2526, %v2527
        %v2529 = vsel %vm347, %v2490, 0.0
        %v2530 = vadd.f32 %v2528, %v2529
        %v2531 = vsel %vm347, %v2491, 0.0
        %v2532 = vadd.f32 %v2530, %v2531
        %v2533 = vsel %vm347, %v2492, 0.0
        %v2534 = vadd.f32 %v2532, %v2533
        %v2535 = vsel %vm347, %v2493, 0.0
        %v2536 = vadd.f32 %v2534, %v2535
        %v2537 = vsel %vm347, %v2494, 0.0
        %v2538 = vadd.f32 %v2536, %v2537
        %v2539 = vsel %vm347, %v2495, 0.0
        %v2540 = vadd.f32 %v2538, %v2539
        %v2541 = vsel %vm347, %v2496, 0.0
        %v2542 = vadd.f32 %v2540, %v2541
        %v2543 = vsel %vm347, %v2497, 0.0
        %v2544 = vadd.f32 %v2542, %v2543
        %v2545 = vsel %vm347, %v2498, 0.0
        %v2546 = vadd.f32 %v2544, %v2545
        %v2547 = vsel %vm347, %v2499, 0.0
        %v2548 = vadd.f32 %v2546, %v2547
        %v2549 = vsel %vm347, %v2500, 0.0
        %v2550 = vadd.f32 %v2548, %v2549
        %v2551 = vsel %vm347, %v2501, 0.0
        %v2552 = vadd.f32 %v2550, %v2551
        %v2553 = vsel %vm347, %v2502, 0.0
        %v2554 = vadd.f32 %v2552, %v2553
        %v2555 = vsel %vm347, %v2503, 0.0
        %v2556 = vadd.f32 %v2554, %v2555
        %v2557 = vsel %vm347, %v2504, 0.0
        %v2558 = vadd.f32 %v2556, %v2557
        %v2559 = vsel %vm347, %v2505, 0.0
        %v2560 = vadd.f32 %v2558, %v2559
        %v2561 = vsel %vm347, %v2506, 0.0
        %v2562 = vadd.f32 %v2560, %v2561
        %v2563 = vsel %vm347, %v2507, 0.0
        %v2564 = vadd.f32 %v2562, %v2563
        %v2565 = vsel %vm347, %v2508, 0.0
        %v2566 = vadd.f32 %v2564, %v2565
        %v2567 = vsel %vm347, %v2509, 0.0
        %v2568 = vadd.f32 %v2566, %v2567
        %v2569 = vsel %vm347, %v2510, 0.0
        %v2570 = vadd.f32 %v2568, %v2569
        %v2571 = vsel %vm347, %v2511, 0.0
        %v2572 = vadd.f32 %v2570, %v2571
        %v2573 = vsel %vm347, %v2512, 0.0
        %v2574 = vadd.f32 %v2572, %v2573
        %v2575 = vsel %vm347, %v2513, 0.0
        %v2576 = vadd.f32 %v2574, %v2575
        %v2577 = vrot.slane %v2576, 4
        %v2578 = vadd.f32 %v2576, %v2577
        %v2579 = vrot.slane %v2578, 2
        %v2580 = vadd.f32 %v2578, %v2579
        %v2581 = vrot.slane %v2580, 1
        %v2582 = vadd.f32 %v2580, %v2581
        %vm2583 = vcmask 1040384
        %v2584 = vsel %vm2583, %v2481, %v2582
        %2585 = vst.msk [vmem:[%s198] sm:$0x3] %vm350, %v2584
        %p2586 = scmp.lt.s32.totalorder %s19, 1
        %s2587 = scalar_select %p2586, %s19, 1
        %s2588 = smul.addr %s2587, 32
        %s2589 = smul.addr %s2588, 4
        %s2590 = scalar_lea.vmem %s3, %s2589
        %s2591 = sand.u32 %s121, 1
        %s2592 = scalar_lea.sflag [#allocation4], %s2591
        %s2593 = sand.u32 %s121, 1
        %s2594 = smul.addr %s2593, 2
        %s2595 = scalar_lea.vmem [#allocation3], %s2594
        // Predicated region
        $region33: #{tpu_custom_call.1} parent=31 // pred_check
          %p2596 = pneg %p105
        $region34: #{tpu_custom_call.1} parent=31 // pred_check_branch
          %2598 = sbr.rel (%p2596) target = $region36
        $region35: #{tpu_custom_call.1} parent=31 // pred_region
          _
        $region36: #{tpu_custom_call.1} parent=31 // pred_fallthru
          _
        // Predicated region
        $region37: #{tpu_custom_call.1} parent=31 // pred_check
          %p2599 = pneg %p131
        $region38: #{tpu_custom_call.1} parent=31 // pred_check_branch
          %2601 = sbr.rel (%p2599) target = $region40
        $region39: #{tpu_custom_call.1} parent=31 // pred_region
          %s2603 = ssub.s32 32, 32
          %2604 = vsyncadd %s2592, %s2603
          %s2605 = smul.addr %s19, 32
          %s2606 = scalar_lea.hbm %s4, %s2605
          %s2608 = sshll.u32 %s2595, 4
          %s2609 = int_to_ptr.vmem [resolvable:$true] %s2608
          %2611 = dma.vmem_to_hbm [thread:$0]  %s2609, 32, %s2606, %s2592
        $region40: #{tpu_custom_call.1} parent=31 // pred_fallthru
          _
      $region32: #{tpu_custom_call.1} parent=5 // pred_fallthru
        _
      %p2612 = scmp.le.s32.totalorder 2, %s14
      // Predicated region
      $region41: #{tpu_custom_call.1} parent=5 // pred_check
        %p2613 = pneg %p2612
      $region42: #{tpu_custom_call.1} parent=5 // pred_check_branch
        %2615 = sbr.rel (%p2613) target = $region44
      $region43: #{tpu_custom_call.1} parent=5 // pred_region
        %s2616 = ssub.s32 %s14, 2
        // Predicated region
        $region45: #{tpu_custom_call.1} parent=43 // pred_check
          %p2617 = pneg %p111
        $region46: #{tpu_custom_call.1} parent=43 // pred_check_branch
          %2619 = sbr.rel (%p2617) target = $region48
        $region47: #{tpu_custom_call.1} parent=43 // pred_region
          %p2620 = scmp.lt.s32.totalorder %s20, 1
          %s2621 = scalar_select %p2620, %s20, 1
          %s2622 = smul.addr %s2621, 32
          %s2623 = smul.addr %s2622, 4
          %s2624 = scalar_lea.vmem %s3, %s2623
        $region48: #{tpu_custom_call.1} parent=43 // pred_fallthru
          _
        // Predicated region
        $region49: #{tpu_custom_call.1} parent=43 // pred_check
          %p2625 = pneg %p137
        $region50: #{tpu_custom_call.1} parent=43 // pred_check_branch
          %2627 = sbr.rel (%p2625) target = $region52
        $region51: #{tpu_custom_call.1} parent=43 // pred_region
          %s2628 = sand.u32 %s122, 1
          %s2629 = scalar_lea.sflag [#allocation4], %s2628
          %s2630 = sand.u32 %s122, 1
          %s2631 = smul.addr %s2630, 2
          %s2632 = scalar_lea.vmem [#allocation3], %s2631
          %2633 = dma.done %s2629, 32
        $region52: #{tpu_custom_call.1} parent=43 // pred_fallthru
          _
      $region44: #{tpu_custom_call.1} parent=5 // pred_fallthru
        _
    $region6: #{tpu_custom_call.1} parent=1 // loop_footer
      %s18 = sadd.s32 1, %s14
    $region7: #{tpu_custom_call.1} parent=1 // loop_footer_branch
      %13 = sbr.rel target = $region3
    $region8: #{tpu_custom_call.1} parent=1 // loop_exit
      _
    %2634 = vsyncpa [#allocation4], 1
    %s2635 = scalar_lea.sflag [#allocation4], 1
    %2636 = vsyncpa %s2635, 1

</llo_original>
